<compile_context>
chip_gen: v6e
topology: v6e:2x2x1
jax: 0.10.0
libtpu: 0.0.40
codegen_flags: <defaults>
</compile_context>

<pallas_src>
import functools

import jax
import jax.numpy as jnp
from jax.experimental import pallas as pl
from jax.experimental.pallas import tpu as pltpu

NODE_IN = 74
EDGE_IN = 12
HIDDEN = 100
PRED_HIDDEN = 64
N_TASKS = 1
N_LAYERS = 2

LANE = 128
SUBLANE = 8


def init_params(key):
    """Deterministic parameter init (PyTorch-style U(-1/sqrt(fan_in), 1/sqrt(fan_in)))."""
    spec = [
        ("W_proj", NODE_IN, (NODE_IN, HIDDEN)),
        ("b_proj", NODE_IN, (1, HIDDEN)),
        ("W_cm_node", HIDDEN + EDGE_IN, (HIDDEN, HIDDEN)),
        ("W_cm_edge", HIDDEN + EDGE_IN, (EDGE_IN, HIDDEN)),
        ("b_cm", HIDDEN + EDGE_IN, (1, HIDDEN)),
        ("W_new_self", 2 * HIDDEN, (HIDDEN, HIDDEN)),
        ("W_new_nbr", 2 * HIDDEN, (HIDDEN, HIDDEN)),
        ("b_new", 2 * HIDDEN, (1, HIDDEN)),
        ("W_pair_node", HIDDEN, (HIDDEN, HIDDEN)),
        ("W_pair_edge", EDGE_IN, (EDGE_IN, HIDDEN)),
        ("W_self", HIDDEN, (HIDDEN, HIDDEN)),
        ("W_aw", HIDDEN, (HIDDEN, 1)),
        ("b_aw", HIDDEN, (1, 1)),
        ("W1_sum", 2 * HIDDEN, (HIDDEN, PRED_HIDDEN)),
        ("W1_max", 2 * HIDDEN, (HIDDEN, PRED_HIDDEN)),
        ("b1", 2 * HIDDEN, (1, PRED_HIDDEN)),
        ("W2", PRED_HIDDEN, (PRED_HIDDEN, N_TASKS)),
        ("b2", PRED_HIDDEN, (1, N_TASKS)),
    ]
    keys = jax.random.split(key, len(spec))
    params = {}
    for (name, fan_in, shape), k in zip(spec, keys):
        bound = 1.0 / float(fan_in) ** 0.5
        params[name] = jax.random.uniform(k, shape, jnp.float32, -bound, bound)
    return params


def _round_up(v, m):
    return ((v + m - 1) // m) * m


def _pad2d(x, rows, cols):
    r, c = x.shape
    return jnp.pad(x, ((0, rows - r), (0, cols - c)))


def wln_predictor_kernel(
    n_layers, n_graphs,
    nf_ref, ef_ref, src_ref, dstT_ref, seg_ref, segT_ref,
    Wp_ref, bp_ref,
    Wcn_ref, Wce_ref, bc_ref,
    Wns_ref, Wnn_ref, bn_ref,
    Wpn_ref, Wpe_ref, Wsf_ref,
    Waw_ref, baw_ref,
    Wfs_ref, Wfm_ref, bf_ref,
    out_ref,
):
    f32 = jnp.float32
    NEG = jnp.finfo(jnp.float32).min   # finite sentinel (no -inf / NaN on padded rows)

    def dot(a, b):
        return jnp.dot(a, b, preferred_element_type=f32)

    def relu(x):
        return jnp.maximum(x, 0.0)

    nf = nf_ref[...]                       # (Np, 128)  padded node feats
    ef = ef_ref[...]                       # (Ep, 128)  padded edge feats
    src = src_ref[...].astype(f32)         # (Ep, Np)   bf16 one-hot (exact) -> f32
    dstT = dstT_ref[...].astype(f32)       # (Np, Ep)
    seg = seg_ref[...]                     # (G, Np)    graph membership
    segT = segT_ref[...]                   # (Np, G)

    # Shared-weight layers: read once, keep in vregs across the static unroll.
    Wcn = Wcn_ref[...]
    Wns = Wns_ref[...]
    Wnn = Wnn_ref[...]
    bn = bn_ref[...]

    # ---- WLN: input projection ---------------------------------------------
    h = relu(dot(nf, Wp_ref[...]) + bp_ref[...])                   # (Np, 128)

    # edge contribution + bias of the concatenated message Linear is
    # layer-invariant: hoist out of the n_layers loop.
    ef_msg_b = dot(ef, Wce_ref[...]) + bc_ref[...]                 # (Ep, 128)

    # ---- WLN: shared-weight message-passing layers (static unroll) ----------
    for _ in range(n_layers):
        # Project at node granularity, then gather:
        #   src @ (h @ Wcn) == (h[src]) @ Wcn   (exact: src is a 0/1 one-hot)
        # but runs the 128x128 projection over Np rows instead of Ep rows.
        msg = relu(dot(src, dot(h, Wcn)) + ef_msg_b)               # (Ep, 128)
        agg = dot(dstT, msg)                                       # scatter-sum to dst -> (Np, 128)
        h = relu(dot(h, Wns) + dot(agg, Wnn) + bn)

    # ---- WLN: set comparison -------------------------------------------------
    hv = dot(h, Wpn_ref[...])
    he = dot(ef, Wpe_ref[...])
    hv_src = dot(src, hv)
    h_nbr = dot(dstT, hv_src * he)
    node_out = h_nbr * dot(h, Wsf_ref[...])                        # (Np, 128)

    # ---- WeightedSumAndMax readout -------------------------------------------
    w = jax.nn.sigmoid(dot(node_out, Waw_ref[...]) + baw_ref[...])  # (Np, 1)
    hg_sum = dot(seg, w * node_out)                                 # (G, 128)

    # Per-graph masked max.  G is small here; for large batches this would move
    # to a per-graph grid tile instead of an unrolled loop.
    max_rows = []
    for gi in range(n_graphs):
        mask_col = segT[:, gi:gi + 1] > 0.5                         # (Np, 1)
        masked = jnp.where(mask_col, node_out, NEG)
        max_rows.append(jnp.max(masked, axis=0, keepdims=True))     # (1, 128)
    hg_max = jnp.concatenate(max_rows, axis=0)                      # (G, 128)

    # ---- predict: folded Linear(2H -> 64) @ Linear(64 -> n_tasks) ------------
    out_ref[...] = dot(hg_sum, Wfs_ref[...]) + dot(hg_max, Wfm_ref[...]) + bf_ref[...]


@functools.partial(jax.jit, static_argnames=("n_layers", "n_graphs"))
def wln_predictor_forward(params, node_feats, edge_feats, src_idx, dst_idx,
                          node_gid, *, n_layers=N_LAYERS, n_graphs=2):
    f32 = jnp.float32
    n_nodes, node_in = node_feats.shape
    n_edges, edge_in = edge_feats.shape
    hidden = params["W_proj"].shape[1]
    n_tasks = params["W2"].shape[1]

    # Padded (lane-dense) dims.
    NIp = _round_up(node_in, LANE)
    EIp = _round_up(edge_in, LANE)
    Hp = _round_up(hidden, LANE)
    Np = _round_up(n_nodes, SUBLANE)
    Ep = _round_up(n_edges, SUBLANE)

    # ---- data: pad rows/lanes; incidence as bf16 (exact for {0,1}) ----------
    nf = _pad2d(node_feats.astype(f32), Np, NIp)
    ef = _pad2d(edge_feats.astype(f32), Ep, EIp)
    src_oh = _pad2d(jax.nn.one_hot(src_idx, n_nodes, dtype=jnp.bfloat16), Ep, Np)
    dst_oh_t = _pad2d(jax.nn.one_hot(dst_idx, n_nodes, dtype=jnp.bfloat16).T, Np, Ep)
    seg = _pad2d(jax.nn.one_hot(node_gid, n_graphs, dtype=f32).T, n_graphs, Np)
    segT = _pad2d(jax.nn.one_hot(node_gid, n_graphs, dtype=f32), Np, n_graphs)

    # ---- weights: zero-pad to lane-dense shapes; fold the 2 prediction Linears
    hi = jax.lax.Precision.HIGHEST
    Wf_sum = jnp.dot(params["W1_sum"], params["W2"], precision=hi)
    Wf_max = jnp.dot(params["W1_max"], params["W2"], precision=hi)
    b_fold = jnp.dot(params["b1"], params["W2"], precision=hi) + params["b2"]

    weights = [
        _pad2d(params["W_proj"], NIp, Hp), _pad2d(params["b_proj"], 1, Hp),
        _pad2d(params["W_cm_node"], Hp, Hp), _pad2d(params["W_cm_edge"], EIp, Hp),
        _pad2d(params["b_cm"], 1, Hp),
        _pad2d(params["W_new_self"], Hp, Hp), _pad2d(params["W_new_nbr"], Hp, Hp),
        _pad2d(params["b_new"], 1, Hp),
        _pad2d(params["W_pair_node"], Hp, Hp), _pad2d(params["W_pair_edge"], EIp, Hp),
        _pad2d(params["W_self"], Hp, Hp),
        _pad2d(params["W_aw"], Hp, 1), params["b_aw"],
        _pad2d(Wf_sum, Hp, n_tasks), _pad2d(Wf_max, Hp, n_tasks), b_fold,
    ]

    inputs = [nf, ef, src_oh, dst_oh_t, seg, segT] + weights
    vmem_spec = pl.BlockSpec(memory_space=pltpu.MemorySpace.VMEM)

    return pl.pallas_call(
        functools.partial(wln_predictor_kernel, n_layers, n_graphs),
        out_shape=jax.ShapeDtypeStruct((n_graphs, n_tasks), f32),
        in_specs=[vmem_spec] * len(inputs),
        out_specs=vmem_spec,
        compiler_params=pltpu.CompilerParams(
            # Everything is VMEM-resident (gridless); keep an explicit cap that is
            # safe on v5e/v6e (128 MiB physical) and v7x (64 MiB physical).
            vmem_limit_bytes=32 * 1024 * 1024,
        ),
    )(*inputs)


def reference_forward(params, node_feats, edge_feats, src_idx, dst_idx,
                      node_gid, n_graphs, n_layers=N_LAYERS):
    """Plain-JAX reference with explicit gather/scatter (mirrors the dgllife forward)."""
    P = jax.lax.Precision.HIGHEST
    dot = lambda a, b: jnp.dot(a, b, precision=P)
    relu = lambda x: jnp.maximum(x, 0.0)

    h = relu(dot(node_feats, params["W_proj"]) + params["b_proj"])
    ef_msg = dot(edge_feats, params["W_cm_edge"])
    for _ in range(n_layers):
        h_src = h[src_idx]
        msg = relu(dot(h_src, params["W_cm_node"]) + ef_msg + params["b_cm"])
        agg = jnp.zeros_like(h).at[dst_idx].add(msg)
        h = relu(dot(h, params["W_new_self"]) + dot(agg, params["W_new_nbr"]) + params["b_new"])

    hv = dot(h, params["W_pair_node"])
    he = dot(edge_feats, params["W_pair_edge"])
    h_nbr = jnp.zeros_like(h).at[dst_idx].add(hv[src_idx] * he)
    node_out = h_nbr * dot(h, params["W_self"])

    w = jax.nn.sigmoid(dot(node_out, params["W_aw"]) + params["b_aw"])
    F = node_out.shape[1]
    hg_sum = jnp.zeros((n_graphs, F), jnp.float32).at[node_gid].add(w * node_out)
    hg_max = jnp.full((n_graphs, F), -jnp.inf, jnp.float32).at[node_gid].max(node_out)

    hid = dot(hg_sum, params["W1_sum"]) + dot(hg_max, params["W1_max"]) + params["b1"]
    return dot(hid, params["W2"]) + params["b2"]


def _ring_edges(start, n):
    src, dst = [], []
    for i in range(n):
        a, b = start + i, start + (i + 1) % n
        src += [a, b]
        dst += [b, a]
    return src, dst


if __name__ == "__main__":
    key = jax.random.PRNGKey(0)
    k_param, k_node, k_edge = jax.random.split(key, 3)

    params = init_params(k_param)

    # Batched "molecular" graph: 2 graphs (7 + 9 nodes), bidirectional ring bonds.
    n0, n1 = 7, 9
    s0, d0 = _ring_edges(0, n0)
    s1, d1 = _ring_edges(n0, n1)
    src_idx = jnp.asarray(s0 + s1, dtype=jnp.int32)
    dst_idx = jnp.asarray(d0 + d1, dtype=jnp.int32)
    node_gid = jnp.asarray([0] * n0 + [1] * n1, dtype=jnp.int32)

    n_nodes = n0 + n1
    n_edges = int(src_idx.shape[0])
    n_graphs = 2

    node_feats = jax.random.normal(k_node, (n_nodes, NODE_IN), jnp.float32)
    edge_feats = jax.random.normal(k_edge, (n_edges, EDGE_IN), jnp.float32)

    out = wln_predictor_forward(params, node_feats, edge_feats, src_idx, dst_idx,
                                node_gid, n_layers=N_LAYERS, n_graphs=n_graphs)
    out = jax.block_until_ready(out)

    ref = reference_forward(params, node_feats, edge_feats, src_idx, dst_idx,
                            node_gid, n_graphs)

    assert out.shape == (n_graphs, N_TASKS)
    assert jnp.allclose(out, ref, rtol=2e-3, atol=2e-3), (out, ref)

    print("KERNEL_OK")
</pallas_src>

<mosaic_0001>
module attributes {stable_mosaic.version = 11 : i64} {
  func.func @wln_predictor_kernel(%arg0: memref<16x128xf32, #tpu.memory_space<vmem>>, %arg1: memref<32x128xf32, #tpu.memory_space<vmem>>, %arg2: memref<32x16xbf16, #tpu.memory_space<vmem>>, %arg3: memref<16x32xbf16, #tpu.memory_space<vmem>>, %arg4: memref<2x16xf32, #tpu.memory_space<vmem>>, %arg5: memref<16x2xf32, #tpu.memory_space<vmem>>, %arg6: memref<128x128xf32, #tpu.memory_space<vmem>>, %arg7: memref<1x128xf32, #tpu.memory_space<vmem>>, %arg8: memref<128x128xf32, #tpu.memory_space<vmem>>, %arg9: memref<128x128xf32, #tpu.memory_space<vmem>>, %arg10: memref<1x128xf32, #tpu.memory_space<vmem>>, %arg11: memref<128x128xf32, #tpu.memory_space<vmem>>, %arg12: memref<128x128xf32, #tpu.memory_space<vmem>>, %arg13: memref<1x128xf32, #tpu.memory_space<vmem>>, %arg14: memref<128x128xf32, #tpu.memory_space<vmem>>, %arg15: memref<128x128xf32, #tpu.memory_space<vmem>>, %arg16: memref<128x128xf32, #tpu.memory_space<vmem>>, %arg17: memref<128x1xf32, #tpu.memory_space<vmem>>, %arg18: memref<1x1xf32, #tpu.memory_space<vmem>>, %arg19: memref<128x1xf32, #tpu.memory_space<vmem>>, %arg20: memref<128x1xf32, #tpu.memory_space<vmem>>, %arg21: memref<1x1xf32, #tpu.memory_space<vmem>>, %arg22: memref<2x1xf32, #tpu.memory_space<vmem>>) attributes {dimension_semantics = [], scalar_prefetch = 0 : i64, scratch_operands = 0 : i64, tpu.core_type = #tpu.core_type<tc>} {
    %c0 = arith.constant 0 : index
    %c0_0 = arith.constant 0 : index
    %0 = vector.load %arg0[%c0, %c0_0] : memref<16x128xf32, #tpu.memory_space<vmem>>, vector<16x128xf32>
    %c0_1 = arith.constant 0 : index
    %c0_2 = arith.constant 0 : index
    %1 = vector.load %arg1[%c0_1, %c0_2] : memref<32x128xf32, #tpu.memory_space<vmem>>, vector<32x128xf32>
    %c0_3 = arith.constant 0 : index
    %c0_4 = arith.constant 0 : index
    %2 = vector.load %arg2[%c0_3, %c0_4] : memref<32x16xbf16, #tpu.memory_space<vmem>>, vector<32x16xbf16>
    %3 = arith.extf %2 : vector<32x16xbf16> to vector<32x16xf32>
    %c0_5 = arith.constant 0 : index
    %c0_6 = arith.constant 0 : index
    %4 = vector.load %arg3[%c0_5, %c0_6] : memref<16x32xbf16, #tpu.memory_space<vmem>>, vector<16x32xbf16>
    %5 = arith.extf %4 : vector<16x32xbf16> to vector<16x32xf32>
    %c0_7 = arith.constant 0 : index
    %c0_8 = arith.constant 0 : index
    %6 = vector.load %arg4[%c0_7, %c0_8] : memref<2x16xf32, #tpu.memory_space<vmem>>, vector<2x16xf32>
    %c0_9 = arith.constant 0 : index
    %c0_10 = arith.constant 0 : index
    %7 = vector.load %arg5[%c0_9, %c0_10] : memref<16x2xf32, #tpu.memory_space<vmem>>, vector<16x2xf32>
    %c0_11 = arith.constant 0 : index
    %c0_12 = arith.constant 0 : index
    %8 = vector.load %arg8[%c0_11, %c0_12] : memref<128x128xf32, #tpu.memory_space<vmem>>, vector<128x128xf32>
    %c0_13 = arith.constant 0 : index
    %c0_14 = arith.constant 0 : index
    %9 = vector.load %arg11[%c0_13, %c0_14] : memref<128x128xf32, #tpu.memory_space<vmem>>, vector<128x128xf32>
    %c0_15 = arith.constant 0 : index
    %c0_16 = arith.constant 0 : index
    %10 = vector.load %arg12[%c0_15, %c0_16] : memref<128x128xf32, #tpu.memory_space<vmem>>, vector<128x128xf32>
    %c0_17 = arith.constant 0 : index
    %c0_18 = arith.constant 0 : index
    %11 = vector.load %arg13[%c0_17, %c0_18] : memref<1x128xf32, #tpu.memory_space<vmem>>, vector<1x128xf32>
    %c0_19 = arith.constant 0 : index
    %c0_20 = arith.constant 0 : index
    %12 = vector.load %arg6[%c0_19, %c0_20] : memref<128x128xf32, #tpu.memory_space<vmem>>, vector<128x128xf32>
    %cst = arith.constant dense<0.000000e+00> : vector<16x128xf32>
    %13 = tpu.matmul %0, %12, %cst {dimension_numbers = #tpu.dot_dimension_numbers<[1], [0], [0], [1], [0, 0, 1, 1], [], []>} : vector<16x128xf32>, vector<128x128xf32>, vector<16x128xf32> -> vector<16x128xf32>
    %c0_21 = arith.constant 0 : index
    %c0_22 = arith.constant 0 : index
    %14 = vector.load %arg7[%c0_21, %c0_22] : memref<1x128xf32, #tpu.memory_space<vmem>>, vector<1x128xf32>
    %15 = vector.broadcast %14 : vector<1x128xf32> to vector<16x128xf32>
    %16 = arith.addf %13, %15 : vector<16x128xf32>
    %cst_23 = arith.constant 0.000000e+00 : f32
    %17 = vector.broadcast %cst_23 : f32 to vector<16x128xf32>
    %18 = arith.maximumf %16, %17 : vector<16x128xf32>
    %c0_24 = arith.constant 0 : index
    %c0_25 = arith.constant 0 : index
    %19 = vector.load %arg9[%c0_24, %c0_25] : memref<128x128xf32, #tpu.memory_space<vmem>>, vector<128x128xf32>
    %cst_26 = arith.constant dense<0.000000e+00> : vector<32x128xf32>
    %20 = tpu.matmul %1, %19, %cst_26 {dimension_numbers = #tpu.dot_dimension_numbers<[1], [0], [0], [1], [0, 0, 1, 1], [], []>} : vector<32x128xf32>, vector<128x128xf32>, vector<32x128xf32> -> vector<32x128xf32>
    %c0_27 = arith.constant 0 : index
    %c0_28 = arith.constant 0 : index
    %21 = vector.load %arg10[%c0_27, %c0_28] : memref<1x128xf32, #tpu.memory_space<vmem>>, vector<1x128xf32>
    %22 = vector.broadcast %21 : vector<1x128xf32> to vector<32x128xf32>
    %23 = arith.addf %20, %22 : vector<32x128xf32>
    %cst_29 = arith.constant dense<0.000000e+00> : vector<16x128xf32>
    %24 = tpu.matmul %18, %8, %cst_29 {dimension_numbers = #tpu.dot_dimension_numbers<[1], [0], [0], [1], [0, 0, 1, 1], [], []>} : vector<16x128xf32>, vector<128x128xf32>, vector<16x128xf32> -> vector<16x128xf32>
    %cst_30 = arith.constant dense<0.000000e+00> : vector<32x128xf32>
    %25 = tpu.matmul %3, %24, %cst_30 {dimension_numbers = #tpu.dot_dimension_numbers<[1], [0], [0], [1], [0, 0, 1, 1], [], []>} : vector<32x16xf32>, vector<16x128xf32>, vector<32x128xf32> -> vector<32x128xf32>
    %26 = arith.addf %25, %23 : vector<32x128xf32>
    %cst_31 = arith.constant 0.000000e+00 : f32
    %27 = vector.broadcast %cst_31 : f32 to vector<32x128xf32>
    %28 = arith.maximumf %26, %27 : vector<32x128xf32>
    %cst_32 = arith.constant dense<0.000000e+00> : vector<16x128xf32>
    %29 = tpu.matmul %5, %28, %cst_32 {dimension_numbers = #tpu.dot_dimension_numbers<[1], [0], [0], [1], [0, 0, 1, 1], [], []>} : vector<16x32xf32>, vector<32x128xf32>, vector<16x128xf32> -> vector<16x128xf32>
    %cst_33 = arith.constant dense<0.000000e+00> : vector<16x128xf32>
    %30 = tpu.matmul %18, %9, %cst_33 {dimension_numbers = #tpu.dot_dimension_numbers<[1], [0], [0], [1], [0, 0, 1, 1], [], []>} : vector<16x128xf32>, vector<128x128xf32>, vector<16x128xf32> -> vector<16x128xf32>
    %cst_34 = arith.constant dense<0.000000e+00> : vector<16x128xf32>
    %31 = tpu.matmul %29, %10, %cst_34 {dimension_numbers = #tpu.dot_dimension_numbers<[1], [0], [0], [1], [0, 0, 1, 1], [], []>} : vector<16x128xf32>, vector<128x128xf32>, vector<16x128xf32> -> vector<16x128xf32>
    %32 = arith.addf %30, %31 : vector<16x128xf32>
    %33 = vector.broadcast %11 : vector<1x128xf32> to vector<16x128xf32>
    %34 = arith.addf %32, %33 : vector<16x128xf32>
    %cst_35 = arith.constant 0.000000e+00 : f32
    %35 = vector.broadcast %cst_35 : f32 to vector<16x128xf32>
    %36 = arith.maximumf %34, %35 : vector<16x128xf32>
    %cst_36 = arith.constant dense<0.000000e+00> : vector<16x128xf32>
    %37 = tpu.matmul %36, %8, %cst_36 {dimension_numbers = #tpu.dot_dimension_numbers<[1], [0], [0], [1], [0, 0, 1, 1], [], []>} : vector<16x128xf32>, vector<128x128xf32>, vector<16x128xf32> -> vector<16x128xf32>
    %cst_37 = arith.constant dense<0.000000e+00> : vector<32x128xf32>
    %38 = tpu.matmul %3, %37, %cst_37 {dimension_numbers = #tpu.dot_dimension_numbers<[1], [0], [0], [1], [0, 0, 1, 1], [], []>} : vector<32x16xf32>, vector<16x128xf32>, vector<32x128xf32> -> vector<32x128xf32>
    %39 = arith.addf %38, %23 : vector<32x128xf32>
    %cst_38 = arith.constant 0.000000e+00 : f32
    %40 = vector.broadcast %cst_38 : f32 to vector<32x128xf32>
    %41 = arith.maximumf %39, %40 : vector<32x128xf32>
    %cst_39 = arith.constant dense<0.000000e+00> : vector<16x128xf32>
    %42 = tpu.matmul %5, %41, %cst_39 {dimension_numbers = #tpu.dot_dimension_numbers<[1], [0], [0], [1], [0, 0, 1, 1], [], []>} : vector<16x32xf32>, vector<32x128xf32>, vector<16x128xf32> -> vector<16x128xf32>
    %cst_40 = arith.constant dense<0.000000e+00> : vector<16x128xf32>
    %43 = tpu.matmul %36, %9, %cst_40 {dimension_numbers = #tpu.dot_dimension_numbers<[1], [0], [0], [1], [0, 0, 1, 1], [], []>} : vector<16x128xf32>, vector<128x128xf32>, vector<16x128xf32> -> vector<16x128xf32>
    %cst_41 = arith.constant dense<0.000000e+00> : vector<16x128xf32>
    %44 = tpu.matmul %42, %10, %cst_41 {dimension_numbers = #tpu.dot_dimension_numbers<[1], [0], [0], [1], [0, 0, 1, 1], [], []>} : vector<16x128xf32>, vector<128x128xf32>, vector<16x128xf32> -> vector<16x128xf32>
    %45 = arith.addf %43, %44 : vector<16x128xf32>
    %46 = vector.broadcast %11 : vector<1x128xf32> to vector<16x128xf32>
    %47 = arith.addf %45, %46 : vector<16x128xf32>
    %cst_42 = arith.constant 0.000000e+00 : f32
    %48 = vector.broadcast %cst_42 : f32 to vector<16x128xf32>
    %49 = arith.maximumf %47, %48 : vector<16x128xf32>
    %c0_43 = arith.constant 0 : index
    %c0_44 = arith.constant 0 : index
    %50 = vector.load %arg14[%c0_43, %c0_44] : memref<128x128xf32, #tpu.memory_space<vmem>>, vector<128x128xf32>
    %cst_45 = arith.constant dense<0.000000e+00> : vector<16x128xf32>
    %51 = tpu.matmul %49, %50, %cst_45 {dimension_numbers = #tpu.dot_dimension_numbers<[1], [0], [0], [1], [0, 0, 1, 1], [], []>} : vector<16x128xf32>, vector<128x128xf32>, vector<16x128xf32> -> vector<16x128xf32>
    %c0_46 = arith.constant 0 : index
    %c0_47 = arith.constant 0 : index
    %52 = vector.load %arg15[%c0_46, %c0_47] : memref<128x128xf32, #tpu.memory_space<vmem>>, vector<128x128xf32>
    %cst_48 = arith.constant dense<0.000000e+00> : vector<32x128xf32>
    %53 = tpu.matmul %1, %52, %cst_48 {dimension_numbers = #tpu.dot_dimension_numbers<[1], [0], [0], [1], [0, 0, 1, 1], [], []>} : vector<32x128xf32>, vector<128x128xf32>, vector<32x128xf32> -> vector<32x128xf32>
    %cst_49 = arith.constant dense<0.000000e+00> : vector<32x128xf32>
    %54 = tpu.matmul %3, %51, %cst_49 {dimension_numbers = #tpu.dot_dimension_numbers<[1], [0], [0], [1], [0, 0, 1, 1], [], []>} : vector<32x16xf32>, vector<16x128xf32>, vector<32x128xf32> -> vector<32x128xf32>
    %55 = arith.mulf %54, %53 : vector<32x128xf32>
    %cst_50 = arith.constant dense<0.000000e+00> : vector<16x128xf32>
    %56 = tpu.matmul %5, %55, %cst_50 {dimension_numbers = #tpu.dot_dimension_numbers<[1], [0], [0], [1], [0, 0, 1, 1], [], []>} : vector<16x32xf32>, vector<32x128xf32>, vector<16x128xf32> -> vector<16x128xf32>
    %c0_51 = arith.constant 0 : index
    %c0_52 = arith.constant 0 : index
    %57 = vector.load %arg16[%c0_51, %c0_52] : memref<128x128xf32, #tpu.memory_space<vmem>>, vector<128x128xf32>
    %cst_53 = arith.constant dense<0.000000e+00> : vector<16x128xf32>
    %58 = tpu.matmul %49, %57, %cst_53 {dimension_numbers = #tpu.dot_dimension_numbers<[1], [0], [0], [1], [0, 0, 1, 1], [], []>} : vector<16x128xf32>, vector<128x128xf32>, vector<16x128xf32> -> vector<16x128xf32>
    %59 = arith.mulf %56, %58 : vector<16x128xf32>
    %c0_54 = arith.constant 0 : index
    %c0_55 = arith.constant 0 : index
    %60 = vector.load %arg17[%c0_54, %c0_55] : memref<128x1xf32, #tpu.memory_space<vmem>>, vector<128x1xf32>
    %cst_56 = arith.constant dense<0.000000e+00> : vector<16x1xf32>
    %61 = tpu.matmul %59, %60, %cst_56 {dimension_numbers = #tpu.dot_dimension_numbers<[1], [0], [0], [1], [0, 0, 1, 1], [], []>} : vector<16x128xf32>, vector<128x1xf32>, vector<16x1xf32> -> vector<16x1xf32>
    %c0_57 = arith.constant 0 : index
    %c0_58 = arith.constant 0 : index
    %62 = vector.load %arg18[%c0_57, %c0_58] : memref<1x1xf32, #tpu.memory_space<vmem>>, vector<1x1xf32>
    %63 = vector.broadcast %62 : vector<1x1xf32> to vector<16x1xf32>
    %64 = arith.addf %61, %63 : vector<16x1xf32>
    %65 = arith.negf %64 : vector<16x1xf32>
    %66 = math.exp %65 : vector<16x1xf32>
    %cst_59 = arith.constant 1.000000e+00 : f32
    %67 = vector.broadcast %cst_59 : f32 to vector<16x1xf32>
    %68 = arith.addf %67, %66 : vector<16x1xf32>
    %69 = arith.divf %67, %68 : vector<16x1xf32>
    %70 = vector.broadcast %69 : vector<16x1xf32> to vector<16x128xf32>
    %71 = arith.mulf %70, %59 : vector<16x128xf32>
    %cst_60 = arith.constant dense<0.000000e+00> : vector<2x128xf32>
    %72 = tpu.matmul %6, %71, %cst_60 {dimension_numbers = #tpu.dot_dimension_numbers<[1], [0], [0], [1], [0, 0, 1, 1], [], []>} : vector<2x16xf32>, vector<16x128xf32>, vector<2x128xf32> -> vector<2x128xf32>
    %73 = vector.extract_strided_slice %7 {offsets = [0, 0], sizes = [16, 1], strides = [1, 1]} : vector<16x2xf32> to vector<16x1xf32>
    %cst_61 = arith.constant 5.000000e-01 : f32
    %74 = vector.broadcast %cst_61 : f32 to vector<16x1xf32>
    %75 = arith.cmpf ogt, %73, %74 : vector<16x1xf32>
    %cst_62 = arith.constant -3.40282347E+38 : f32
    %76 = vector.shape_cast %75 : vector<16x1xi1> to vector<16x1xi1>
    %77 = vector.broadcast %76 : vector<16x1xi1> to vector<16x128xi1>
    %78 = vector.broadcast %cst_62 : f32 to vector<16x128xf32>
    %79 = arith.select %77, %59, %78 : vector<16x128xi1>, vector<16x128xf32>
    %cst_63 = arith.constant dense<0xFF800000> : vector<128xf32>
    %80 = vector.multi_reduction <maximumf>, %79, %cst_63 [0] : vector<16x128xf32> to vector<128xf32>
    %81 = vector.shape_cast %80 : vector<128xf32> to vector<1x128xf32>
    %82 = vector.extract_strided_slice %7 {offsets = [0, 1], sizes = [16, 1], strides = [1, 1]} : vector<16x2xf32> to vector<16x1xf32>
    %cst_64 = arith.constant 5.000000e-01 : f32
    %83 = vector.broadcast %cst_64 : f32 to vector<16x1xf32>
    %84 = arith.cmpf ogt, %82, %83 : vector<16x1xf32>
    %cst_65 = arith.constant -3.40282347E+38 : f32
    %85 = vector.shape_cast %84 : vector<16x1xi1> to vector<16x1xi1>
    %86 = vector.broadcast %85 : vector<16x1xi1> to vector<16x128xi1>
    %87 = vector.broadcast %cst_65 : f32 to vector<16x128xf32>
    %88 = arith.select %86, %59, %87 : vector<16x128xi1>, vector<16x128xf32>
    %cst_66 = arith.constant dense<0xFF800000> : vector<128xf32>
    %89 = vector.multi_reduction <maximumf>, %88, %cst_66 [0] : vector<16x128xf32> to vector<128xf32>
    %90 = vector.shape_cast %89 : vector<128xf32> to vector<1x128xf32>
    %91 = tpu.concatenate %81, %90 in 0 : vector<1x128xf32>, vector<1x128xf32> -> vector<2x128xf32>
    %c0_67 = arith.constant 0 : index
    %c0_68 = arith.constant 0 : index
    %92 = vector.load %arg19[%c0_67, %c0_68] : memref<128x1xf32, #tpu.memory_space<vmem>>, vector<128x1xf32>
    %cst_69 = arith.constant dense<0.000000e+00> : vector<2x1xf32>
    %93 = tpu.matmul %72, %92, %cst_69 {dimension_numbers = #tpu.dot_dimension_numbers<[1], [0], [0], [1], [0, 0, 1, 1], [], []>} : vector<2x128xf32>, vector<128x1xf32>, vector<2x1xf32> -> vector<2x1xf32>
    %c0_70 = arith.constant 0 : index
    %c0_71 = arith.constant 0 : index
    %94 = vector.load %arg20[%c0_70, %c0_71] : memref<128x1xf32, #tpu.memory_space<vmem>>, vector<128x1xf32>
    %cst_72 = arith.constant dense<0.000000e+00> : vector<2x1xf32>
    %95 = tpu.matmul %91, %94, %cst_72 {dimension_numbers = #tpu.dot_dimension_numbers<[1], [0], [0], [1], [0, 0, 1, 1], [], []>} : vector<2x128xf32>, vector<128x1xf32>, vector<2x1xf32> -> vector<2x1xf32>
    %96 = arith.addf %93, %95 : vector<2x1xf32>
    %c0_73 = arith.constant 0 : index
    %c0_74 = arith.constant 0 : index
    %97 = vector.load %arg21[%c0_73, %c0_74] : memref<1x1xf32, #tpu.memory_space<vmem>>, vector<1x1xf32>
    %98 = vector.broadcast %97 : vector<1x1xf32> to vector<2x1xf32>
    %99 = arith.addf %96, %98 : vector<2x1xf32>
    %c0_75 = arith.constant 0 : index
    %c0_76 = arith.constant 0 : index
    %100 = vector.load %arg22[%c0_75, %c0_76] : memref<2x1xf32, #tpu.memory_space<vmem>>, vector<2x1xf32>
    tpu.vector_store %arg22[%c0_75, %c0_76], %99 {strides = array<i32>} : memref<2x1xf32, #tpu.memory_space<vmem>>, vector<2x1xf32>,
    return
  }
}

</mosaic_0001>

<llo_original>
// kernel: wln_predictor_forward.1
$region0: #{wln_predictor_forward.1}
  #allocation0 [shape = 'u32[]', space=smem, size = 0x4, offset = 0x4, fixed_abs, tag = 'smem constant byte address 0x4 - core index']
  #allocation1 [shape = 'u32[144,128]{1,0:T(1,128)}', space=vmem, size = 0x12000, scoped, tag = 'internal scratch']
  #allocation2 [shape = 'f32[1,1]{1,0:T(1,128)S(1)}', space=vmem, size = 0x200, scoped, tag = 'scoped memory for wln_predictor_forward.1']
  #allocation3 [shape = 'f32[1,1]{1,0:T(1,128)S(1)}', space=vmem, size = 0x200, scoped, tag = 'scoped memory for wln_predictor_forward.1']
  %s0 = inlined_call_operand.vmem [shape: f32[16,128], index: 0, kind: input, shape index: {}]
  %s1 = inlined_call_operand.vmem [shape: f32[32,128], index: 1, kind: input, shape index: {}]
  %s2 = inlined_call_operand.vmem [shape: bf16[32,16], index: 2, kind: input, shape index: {}]
  %s3 = inlined_call_operand.vmem [shape: bf16[16,32], index: 3, kind: input, shape index: {}]
  %s4 = inlined_call_operand.vmem [shape: f32[2,16], index: 4, kind: input, shape index: {}]
  %s5 = inlined_call_operand.vmem [shape: f32[16,2], index: 5, kind: input, shape index: {}]
  %s6 = inlined_call_operand.vmem [shape: f32[128,128], index: 6, kind: input, shape index: {}]
  %s7 = inlined_call_operand.vmem [shape: f32[1,128], index: 7, kind: input, shape index: {}]
  %s8 = inlined_call_operand.vmem [shape: f32[128,128], index: 8, kind: input, shape index: {}]
  %s9 = inlined_call_operand.vmem [shape: f32[128,128], index: 9, kind: input, shape index: {}]
  %s10 = inlined_call_operand.vmem [shape: f32[1,128], index: 10, kind: input, shape index: {}]
  %s11 = inlined_call_operand.vmem [shape: f32[128,128], index: 11, kind: input, shape index: {}]
  %s12 = inlined_call_operand.vmem [shape: f32[128,128], index: 12, kind: input, shape index: {}]
  %s13 = inlined_call_operand.vmem [shape: f32[1,128], index: 13, kind: input, shape index: {}]
  %s14 = inlined_call_operand.vmem [shape: f32[128,128], index: 14, kind: input, shape index: {}]
  %s15 = inlined_call_operand.vmem [shape: f32[128,128], index: 15, kind: input, shape index: {}]
  %s16 = inlined_call_operand.vmem [shape: f32[128,128], index: 16, kind: input, shape index: {}]
  %s17 = inlined_call_operand.vmem [shape: f32[128,1], index: 17, kind: input, shape index: {}]
  %s18 = inlined_call_operand.<no memory space> [shape: f32[1,1], index: 18, kind: input, shape index: {}]
  %s19 = inlined_call_operand.vmem [shape: f32[128,1], index: 19, kind: input, shape index: {}]
  %s20 = inlined_call_operand.vmem [shape: f32[128,1], index: 20, kind: input, shape index: {}]
  %s21 = inlined_call_operand.<no memory space> [shape: f32[1,1], index: 21, kind: input, shape index: {}]
  %s22 = inlined_call_operand.vmem [shape: f32[2,1], index: 22, kind: output, shape index: {}]
  %s23 = sld [smem:[#allocation0]]
  $region98: #{wln_predictor_forward.1} parent=0
    _
  %s25 = ssub.s32 1, %s23
  %s26 = scalar_select 0, %s25, %s23
  %v27 = vstv %s18
  %28 = vst [vmem:[#allocation2] sm:$0x1] %v27
  %v29 = vstv %s21
  %30 = vst [vmem:[#allocation3] sm:$0x1] %v29
  // Predicated region
  $region2: #{wln_predictor_forward.1} parent=0 // pred_check
    _
  $region3: #{wln_predictor_forward.1} parent=0 // pred_check_branch
    %32 = sbr.rel (0) target = $region5
  $region4: #{wln_predictor_forward.1} parent=0 // pred_region
    _
  $region5: #{wln_predictor_forward.1} parent=0 // pred_fallthru
    _
  // Predicated region
  $region6: #{wln_predictor_forward.1} parent=0 // pred_check
    _
  $region7: #{wln_predictor_forward.1} parent=0 // pred_check_branch
    %34 = sbr.rel (0) target = $region9
  $region8: #{wln_predictor_forward.1} parent=0 // pred_region
    _
  $region9: #{wln_predictor_forward.1} parent=0 // pred_fallthru
    _
  // Predicated region
  $region10: #{wln_predictor_forward.1} parent=0 // pred_check
    _
  $region11: #{wln_predictor_forward.1} parent=0 // pred_check_branch
    %36 = sbr.rel (0) target = $region13
  $region12: #{wln_predictor_forward.1} parent=0 // pred_region
    _
  $region13: #{wln_predictor_forward.1} parent=0 // pred_fallthru
    _
  // Predicated region
  $region14: #{wln_predictor_forward.1} parent=0 // pred_check
    _
  $region15: #{wln_predictor_forward.1} parent=0 // pred_check_branch
    %38 = sbr.rel (0) target = $region17
  $region16: #{wln_predictor_forward.1} parent=0 // pred_region
    _
  $region17: #{wln_predictor_forward.1} parent=0 // pred_fallthru
    _
  // Predicated region
  $region18: #{wln_predictor_forward.1} parent=0 // pred_check
    _
  $region19: #{wln_predictor_forward.1} parent=0 // pred_check_branch
    %40 = sbr.rel (0) target = $region21
  $region20: #{wln_predictor_forward.1} parent=0 // pred_region
    _
  $region21: #{wln_predictor_forward.1} parent=0 // pred_fallthru
    _
  // Predicated region
  $region22: #{wln_predictor_forward.1} parent=0 // pred_check
    _
  $region23: #{wln_predictor_forward.1} parent=0 // pred_check_branch
    %42 = sbr.rel (0) target = $region25
  $region24: #{wln_predictor_forward.1} parent=0 // pred_region
    _
  $region25: #{wln_predictor_forward.1} parent=0 // pred_fallthru
    _
  // Predicated region
  $region26: #{wln_predictor_forward.1} parent=0 // pred_check
    _
  $region27: #{wln_predictor_forward.1} parent=0 // pred_check_branch
    %44 = sbr.rel (0) target = $region29
  $region28: #{wln_predictor_forward.1} parent=0 // pred_region
    _
  $region29: #{wln_predictor_forward.1} parent=0 // pred_fallthru
    _
  // Predicated region
  $region30: #{wln_predictor_forward.1} parent=0 // pred_check
    _
  $region31: #{wln_predictor_forward.1} parent=0 // pred_check_branch
    %46 = sbr.rel (0) target = $region33
  $region32: #{wln_predictor_forward.1} parent=0 // pred_region
    _
  $region33: #{wln_predictor_forward.1} parent=0 // pred_fallthru
    _
  // Predicated region
  $region34: #{wln_predictor_forward.1} parent=0 // pred_check
    _
  $region35: #{wln_predictor_forward.1} parent=0 // pred_check_branch
    %48 = sbr.rel (0) target = $region37
  $region36: #{wln_predictor_forward.1} parent=0 // pred_region
    _
  $region37: #{wln_predictor_forward.1} parent=0 // pred_fallthru
    _
  // Predicated region
  $region38: #{wln_predictor_forward.1} parent=0 // pred_check
    _
  $region39: #{wln_predictor_forward.1} parent=0 // pred_check_branch
    %50 = sbr.rel (0) target = $region41
  $region40: #{wln_predictor_forward.1} parent=0 // pred_region
    _
  $region41: #{wln_predictor_forward.1} parent=0 // pred_fallthru
    _
  // Predicated region
  $region42: #{wln_predictor_forward.1} parent=0 // pred_check
    _
  $region43: #{wln_predictor_forward.1} parent=0 // pred_check_branch
    %52 = sbr.rel (0) target = $region45
  $region44: #{wln_predictor_forward.1} parent=0 // pred_region
    _
  $region45: #{wln_predictor_forward.1} parent=0 // pred_fallthru
    _
  // Predicated region
  $region46: #{wln_predictor_forward.1} parent=0 // pred_check
    _
  $region47: #{wln_predictor_forward.1} parent=0 // pred_check_branch
    %54 = sbr.rel (0) target = $region49
  $region48: #{wln_predictor_forward.1} parent=0 // pred_region
    _
  $region49: #{wln_predictor_forward.1} parent=0 // pred_fallthru
    _
  // Predicated region
  $region50: #{wln_predictor_forward.1} parent=0 // pred_check
    _
  $region51: #{wln_predictor_forward.1} parent=0 // pred_check_branch
    %56 = sbr.rel (0) target = $region53
  $region52: #{wln_predictor_forward.1} parent=0 // pred_region
    _
  $region53: #{wln_predictor_forward.1} parent=0 // pred_fallthru
    _
  // Predicated region
  $region54: #{wln_predictor_forward.1} parent=0 // pred_check
    _
  $region55: #{wln_predictor_forward.1} parent=0 // pred_check_branch
    %58 = sbr.rel (0) target = $region57
  $region56: #{wln_predictor_forward.1} parent=0 // pred_region
    _
  $region57: #{wln_predictor_forward.1} parent=0 // pred_fallthru
    _
  // Predicated region
  $region58: #{wln_predictor_forward.1} parent=0 // pred_check
    _
  $region59: #{wln_predictor_forward.1} parent=0 // pred_check_branch
    %60 = sbr.rel (0) target = $region61
  $region60: #{wln_predictor_forward.1} parent=0 // pred_region
    _
  $region61: #{wln_predictor_forward.1} parent=0 // pred_fallthru
    _
  // Predicated region
  $region62: #{wln_predictor_forward.1} parent=0 // pred_check
    _
  $region63: #{wln_predictor_forward.1} parent=0 // pred_check_branch
    %62 = sbr.rel (0) target = $region65
  $region64: #{wln_predictor_forward.1} parent=0 // pred_region
    _
  $region65: #{wln_predictor_forward.1} parent=0 // pred_fallthru
    _
  // Predicated region
  $region66: #{wln_predictor_forward.1} parent=0 // pred_check
    _
  $region67: #{wln_predictor_forward.1} parent=0 // pred_check_branch
    %64 = sbr.rel (0) target = $region69
  $region68: #{wln_predictor_forward.1} parent=0 // pred_region
    _
  $region69: #{wln_predictor_forward.1} parent=0 // pred_fallthru
    _
  // Predicated region
  $region70: #{wln_predictor_forward.1} parent=0 // pred_check
    _
  $region71: #{wln_predictor_forward.1} parent=0 // pred_check_branch
    %66 = sbr.rel (0) target = $region73
  $region72: #{wln_predictor_forward.1} parent=0 // pred_region
    _
  $region73: #{wln_predictor_forward.1} parent=0 // pred_fallthru
    _
  // Predicated region
  $region74: #{wln_predictor_forward.1} parent=0 // pred_check
    _
  $region75: #{wln_predictor_forward.1} parent=0 // pred_check_branch
    %68 = sbr.rel (0) target = $region77
  $region76: #{wln_predictor_forward.1} parent=0 // pred_region
    _
  $region77: #{wln_predictor_forward.1} parent=0 // pred_fallthru
    _
  // Predicated region
  $region78: #{wln_predictor_forward.1} parent=0 // pred_check
    _
  $region79: #{wln_predictor_forward.1} parent=0 // pred_check_branch
    %70 = sbr.rel (0) target = $region81
  $region80: #{wln_predictor_forward.1} parent=0 // pred_region
    _
  $region81: #{wln_predictor_forward.1} parent=0 // pred_fallthru
    _
  // Predicated region
  $region82: #{wln_predictor_forward.1} parent=0 // pred_check
    _
  $region83: #{wln_predictor_forward.1} parent=0 // pred_check_branch
    %72 = sbr.rel (0) target = $region85
  $region84: #{wln_predictor_forward.1} parent=0 // pred_region
    _
  $region85: #{wln_predictor_forward.1} parent=0 // pred_fallthru
    _
  // Predicated region
  $region86: #{wln_predictor_forward.1} parent=0 // pred_check
    _
  $region87: #{wln_predictor_forward.1} parent=0 // pred_check_branch
    %74 = sbr.rel (0) target = $region89
  $region88: #{wln_predictor_forward.1} parent=0 // pred_region
    _
  $region89: #{wln_predictor_forward.1} parent=0 // pred_fallthru
    _
  %v75 = vld [vmem:[%s0] sm:$0xff]
  %v76 = vld [vmem:[%s0 + $0x8] sm:$0xff]
  %v77 = vld [vmem:[%s1] sm:$0xff]
  %v78 = vld [vmem:[%s1 + $0x8] sm:$0xff]
  %v79 = vld [vmem:[%s1 + $0x10] sm:$0xff]
  %v80 = vld [vmem:[%s1 + $0x18] sm:$0xff]
  %v81 = vld [vmem:[%s2] sm:$0xf]
  %v82 = vld [vmem:[%s2 + $0x4] sm:$0xf]
  %v83 = vld [vmem:[%s2 + $0x8] sm:$0xf]
  %v84 = vld [vmem:[%s2 + $0xc] sm:$0xf]
  %v85 = vunpack.c.l.bf16 %v81
  %v86 = vunpack.c.l.bf16 %v82
  %v87 = vunpack.c.l.bf16 %v83
  %v88 = vunpack.c.l.bf16 %v84
  %v89 = vld [vmem:[%s3] sm:$0xf]
  %v90 = vld [vmem:[%s3 + $0x4] sm:$0xf]
  %v91 = vunpack.c.l.bf16 %v89
  %v92 = vunpack.c.l.bf16 %v90
  %v93 = vld [vmem:[%s4] sm:$0x3]
  %v94 = vld [vmem:[%s5] sm:$0xff]
  %v95 = vld [vmem:[%s5 + $0x8] sm:$0xff]
  %v96 = vld [vmem:[%s8] sm:$0xff]
  %v97 = vld [vmem:[%s8 + $0x8] sm:$0xff]
  %v98 = vld [vmem:[%s8 + $0x10] sm:$0xff]
  %v99 = vld [vmem:[%s8 + $0x18] sm:$0xff]
  %v100 = vld [vmem:[%s8 + $0x20] sm:$0xff]
  %v101 = vld [vmem:[%s8 + $0x28] sm:$0xff]
  %v102 = vld [vmem:[%s8 + $0x30] sm:$0xff]
  %v103 = vld [vmem:[%s8 + $0x38] sm:$0xff]
  %v104 = vld [vmem:[%s8 + $0x40] sm:$0xff]
  %v105 = vld [vmem:[%s8 + $0x48] sm:$0xff]
  %v106 = vld [vmem:[%s8 + $0x50] sm:$0xff]
  %v107 = vld [vmem:[%s8 + $0x58] sm:$0xff]
  %v108 = vld [vmem:[%s8 + $0x60] sm:$0xff]
  %v109 = vld [vmem:[%s8 + $0x68] sm:$0xff]
  %v110 = vld [vmem:[%s8 + $0x70] sm:$0xff]
  %v111 = vld [vmem:[%s8 + $0x78] sm:$0xff]
  %v112 = vld [vmem:[%s11] sm:$0xff]
  %v113 = vld [vmem:[%s11 + $0x8] sm:$0xff]
  %v114 = vld [vmem:[%s11 + $0x10] sm:$0xff]
  %v115 = vld [vmem:[%s11 + $0x18] sm:$0xff]
  %v116 = vld [vmem:[%s11 + $0x20] sm:$0xff]
  %v117 = vld [vmem:[%s11 + $0x28] sm:$0xff]
  %v118 = vld [vmem:[%s11 + $0x30] sm:$0xff]
  %v119 = vld [vmem:[%s11 + $0x38] sm:$0xff]
  %v120 = vld [vmem:[%s11 + $0x40] sm:$0xff]
  %v121 = vld [vmem:[%s11 + $0x48] sm:$0xff]
  %v122 = vld [vmem:[%s11 + $0x50] sm:$0xff]
  %v123 = vld [vmem:[%s11 + $0x58] sm:$0xff]
  %v124 = vld [vmem:[%s11 + $0x60] sm:$0xff]
  %v125 = vld [vmem:[%s11 + $0x68] sm:$0xff]
  %v126 = vld [vmem:[%s11 + $0x70] sm:$0xff]
  %v127 = vld [vmem:[%s11 + $0x78] sm:$0xff]
  %v128 = vld [vmem:[%s12] sm:$0xff]
  %v129 = vld [vmem:[%s12 + $0x8] sm:$0xff]
  %v130 = vld [vmem:[%s12 + $0x10] sm:$0xff]
  %v131 = vld [vmem:[%s12 + $0x18] sm:$0xff]
  %v132 = vld [vmem:[%s12 + $0x20] sm:$0xff]
  %v133 = vld [vmem:[%s12 + $0x28] sm:$0xff]
  %v134 = vld [vmem:[%s12 + $0x30] sm:$0xff]
  %v135 = vld [vmem:[%s12 + $0x38] sm:$0xff]
  %v136 = vld [vmem:[%s12 + $0x40] sm:$0xff]
  %v137 = vld [vmem:[%s12 + $0x48] sm:$0xff]
  %v138 = vld [vmem:[%s12 + $0x50] sm:$0xff]
  %v139 = vld [vmem:[%s12 + $0x58] sm:$0xff]
  %v140 = vld [vmem:[%s12 + $0x60] sm:$0xff]
  %v141 = vld [vmem:[%s12 + $0x68] sm:$0xff]
  %v142 = vld [vmem:[%s12 + $0x70] sm:$0xff]
  %v143 = vld [vmem:[%s12 + $0x78] sm:$0xff]
  %v144 = vld [vmem:[%s13] sm:$0x1]
  %v145 = vld [vmem:[%s6] sm:$0xff]
  %v146 = vld [vmem:[%s6 + $0x8] sm:$0xff]
  %v147 = vld [vmem:[%s6 + $0x10] sm:$0xff]
  %v148 = vld [vmem:[%s6 + $0x18] sm:$0xff]
  %v149 = vld [vmem:[%s6 + $0x20] sm:$0xff]
  %v150 = vld [vmem:[%s6 + $0x28] sm:$0xff]
  %v151 = vld [vmem:[%s6 + $0x30] sm:$0xff]
  %v152 = vld [vmem:[%s6 + $0x38] sm:$0xff]
  %v153 = vld [vmem:[%s6 + $0x40] sm:$0xff]
  %v154 = vld [vmem:[%s6 + $0x48] sm:$0xff]
  %v155 = vld [vmem:[%s6 + $0x50] sm:$0xff]
  %v156 = vld [vmem:[%s6 + $0x58] sm:$0xff]
  %v157 = vld [vmem:[%s6 + $0x60] sm:$0xff]
  %v158 = vld [vmem:[%s6 + $0x68] sm:$0xff]
  %v159 = vld [vmem:[%s6 + $0x70] sm:$0xff]
  %v160 = vld [vmem:[%s6 + $0x78] sm:$0xff]
  %v161 = vld [vmem:[%s7] sm:$0x1]
  %v163 = vlaneseq
  %v164 = vshrl.u32 %v163, 7
  %v165 = vsub.s32 0, %v164
  %v166 = vrot.slane %v161, %v165
  %168 = vmatprep.subr.mxu0 0.0
  %169 = vmatpush1.msra.mxu0 %v160
  %170 = vmatprep.subr.mxu0 0.0
  %171 = vmatpush1.msra.mxu0 %v159
  %172 = vmatprep.subr.mxu0 0.0
  %173 = vmatpush1.msra.mxu0 %v158
  %174 = vmatprep.subr.mxu0 0.0
  %175 = vmatpush1.msra.mxu0 %v157
  %176 = vmatprep.subr.mxu0 0.0
  %177 = vmatpush1.msra.mxu0 %v156
  %178 = vmatprep.subr.mxu0 0.0
  %179 = vmatpush1.msra.mxu0 %v155
  %180 = vmatprep.subr.mxu0 0.0
  %181 = vmatpush1.msra.mxu0 %v154
  %182 = vmatprep.subr.mxu0 0.0
  %183 = vmatpush1.msra.mxu0 %v153
  %184 = vmatprep.subr.mxu0 0.0
  %185 = vmatpush1.msra.mxu0 %v152
  %186 = vmatprep.subr.mxu0 0.0
  %187 = vmatpush1.msra.mxu0 %v151
  %188 = vmatprep.subr.mxu0 0.0
  %189 = vmatpush1.msra.mxu0 %v150
  %190 = vmatprep.subr.mxu0 0.0
  %191 = vmatpush1.msra.mxu0 %v149
  %192 = vmatprep.subr.mxu0 0.0
  %193 = vmatpush1.msra.mxu0 %v148
  %194 = vmatprep.subr.mxu0 0.0
  %195 = vmatpush1.msra.mxu0 %v147
  %196 = vmatprep.subr.mxu0 0.0
  %197 = vmatpush1.msra.mxu0 %v146
  %198 = vmatprep.subr.mxu0 0.0
  %199 = vmatpush1.msra.mxu0 %v145
  %200 = vmatprep.subr.mxu0 0.0
  %201 = vmatpush2.msra.mxu0 0.0
  %202 = vmatprep.subr.mxu0 0.0
  %203 = vmatpush2.msra.mxu0 0.0
  %204 = vmatprep.subr.mxu0 0.0
  %205 = vmatpush2.msra.mxu0 0.0
  %206 = vmatprep.subr.mxu0 0.0
  %207 = vmatpush2.msra.mxu0 0.0
  %208 = vmatprep.subr.mxu0 0.0
  %209 = vmatpush2.msra.mxu0 0.0
  %210 = vmatprep.subr.mxu0 0.0
  %211 = vmatpush2.msra.mxu0 0.0
  %212 = vmatprep.subr.mxu0 0.0
  %213 = vmatpush2.msra.mxu0 0.0
  %214 = vmatprep.subr.mxu0 0.0
  %215 = vmatpush2.msra.mxu0 0.0
  %216 = vmatprep.subr.mxu0 0.0
  %217 = vmatpush2.msra.mxu0 0.0
  %218 = vmatprep.subr.mxu0 0.0
  %219 = vmatpush2.msra.mxu0 0.0
  %220 = vmatprep.subr.mxu0 0.0
  %221 = vmatpush2.msra.mxu0 0.0
  %222 = vmatprep.subr.mxu0 0.0
  %223 = vmatpush2.msra.mxu0 0.0
  %224 = vmatprep.subr.mxu0 0.0
  %225 = vmatpush2.msra.mxu0 0.0
  %226 = vmatprep.subr.mxu0 0.0
  %227 = vmatpush2.msra.mxu0 0.0
  %228 = vmatprep.subr.mxu0 0.0
  %229 = vmatpush2.msra.mxu0 0.0
  %230 = vmatprep.subr.mxu0 0.0
  %231 = vmatpush2.msra.mxu0 0.0
  %232 = vmatprep.mubr.f32.mxu0 0.0
  %233 = vmatmul.mubr.f32.gmra.mxu0 %v75
  %v234 = vpop.f32.mrf.mxu0
  %v235 = vadd.f32 %v166, %v234
  %v236 = vpop.f32.mrf.mxu0
  %237 = vmatprep.mubr.f32.mxu0 0.0
  %238 = vmatmul.mubr.f32.gmra.mxu0 %v76
  %v239 = vpop.f32.mrf.mxu0
  %v240 = vadd.f32 %v166, %v239
  %v241 = vpop.f32.mrf.mxu0
  %242 = vdwg.mxu0
  %v243 = vmax.f32 %v235, 0.0
  %v244 = vmax.f32 %v240, 0.0
  %v245 = vld [vmem:[%s9] sm:$0xff]
  %v246 = vld [vmem:[%s9 + $0x8] sm:$0xff]
  %v247 = vld [vmem:[%s9 + $0x10] sm:$0xff]
  %v248 = vld [vmem:[%s9 + $0x18] sm:$0xff]
  %v249 = vld [vmem:[%s9 + $0x20] sm:$0xff]
  %v250 = vld [vmem:[%s9 + $0x28] sm:$0xff]
  %v251 = vld [vmem:[%s9 + $0x30] sm:$0xff]
  %v252 = vld [vmem:[%s9 + $0x38] sm:$0xff]
  %v253 = vld [vmem:[%s9 + $0x40] sm:$0xff]
  %v254 = vld [vmem:[%s9 + $0x48] sm:$0xff]
  %v255 = vld [vmem:[%s9 + $0x50] sm:$0xff]
  %v256 = vld [vmem:[%s9 + $0x58] sm:$0xff]
  %v257 = vld [vmem:[%s9 + $0x60] sm:$0xff]
  %v258 = vld [vmem:[%s9 + $0x68] sm:$0xff]
  %v259 = vld [vmem:[%s9 + $0x70] sm:$0xff]
  %v260 = vld [vmem:[%s9 + $0x78] sm:$0xff]
  %v261 = vld [vmem:[%s10] sm:$0x1]
  %v263 = vlaneseq
  %v264 = vshrl.u32 %v263, 7
  %v265 = vsub.s32 0, %v264
  %v266 = vrot.slane %v261, %v265
  %268 = vmatprep.subr.mxu0 0.0
  %269 = vmatpush1.msra.mxu0 %v260
  %270 = vmatprep.subr.mxu0 0.0
  %271 = vmatpush1.msra.mxu0 %v259
  %272 = vmatprep.subr.mxu0 0.0
  %273 = vmatpush1.msra.mxu0 %v258
  %274 = vmatprep.subr.mxu0 0.0
  %275 = vmatpush1.msra.mxu0 %v257
  %276 = vmatprep.subr.mxu0 0.0
  %277 = vmatpush1.msra.mxu0 %v256
  %278 = vmatprep.subr.mxu0 0.0
  %279 = vmatpush1.msra.mxu0 %v255
  %280 = vmatprep.subr.mxu0 0.0
  %281 = vmatpush1.msra.mxu0 %v254
  %282 = vmatprep.subr.mxu0 0.0
  %283 = vmatpush1.msra.mxu0 %v253
  %284 = vmatprep.subr.mxu0 0.0
  %285 = vmatpush1.msra.mxu0 %v252
  %286 = vmatprep.subr.mxu0 0.0
  %287 = vmatpush1.msra.mxu0 %v251
  %288 = vmatprep.subr.mxu0 0.0
  %289 = vmatpush1.msra.mxu0 %v250
  %290 = vmatprep.subr.mxu0 0.0
  %291 = vmatpush1.msra.mxu0 %v249
  %292 = vmatprep.subr.mxu0 0.0
  %293 = vmatpush1.msra.mxu0 %v248
  %294 = vmatprep.subr.mxu0 0.0
  %295 = vmatpush1.msra.mxu0 %v247
  %296 = vmatprep.subr.mxu0 0.0
  %297 = vmatpush1.msra.mxu0 %v246
  %298 = vmatprep.subr.mxu0 0.0
  %299 = vmatpush1.msra.mxu0 %v245
  %300 = vmatprep.subr.mxu0 0.0
  %301 = vmatpush2.msra.mxu0 0.0
  %302 = vmatprep.subr.mxu0 0.0
  %303 = vmatpush2.msra.mxu0 0.0
  %304 = vmatprep.subr.mxu0 0.0
  %305 = vmatpush2.msra.mxu0 0.0
  %306 = vmatprep.subr.mxu0 0.0
  %307 = vmatpush2.msra.mxu0 0.0
  %308 = vmatprep.subr.mxu0 0.0
  %309 = vmatpush2.msra.mxu0 0.0
  %310 = vmatprep.subr.mxu0 0.0
  %311 = vmatpush2.msra.mxu0 0.0
  %312 = vmatprep.subr.mxu0 0.0
  %313 = vmatpush2.msra.mxu0 0.0
  %314 = vmatprep.subr.mxu0 0.0
  %315 = vmatpush2.msra.mxu0 0.0
  %316 = vmatprep.subr.mxu0 0.0
  %317 = vmatpush2.msra.mxu0 0.0
  %318 = vmatprep.subr.mxu0 0.0
  %319 = vmatpush2.msra.mxu0 0.0
  %320 = vmatprep.subr.mxu0 0.0
  %321 = vmatpush2.msra.mxu0 0.0
  %322 = vmatprep.subr.mxu0 0.0
  %323 = vmatpush2.msra.mxu0 0.0
  %324 = vmatprep.subr.mxu0 0.0
  %325 = vmatpush2.msra.mxu0 0.0
  %326 = vmatprep.subr.mxu0 0.0
  %327 = vmatpush2.msra.mxu0 0.0
  %328 = vmatprep.subr.mxu0 0.0
  %329 = vmatpush2.msra.mxu0 0.0
  %330 = vmatprep.subr.mxu0 0.0
  %331 = vmatpush2.msra.mxu0 0.0
  %332 = vmatprep.mubr.f32.mxu0 0.0
  %333 = vmatmul.mubr.f32.gmra.mxu0 %v77
  %v334 = vpop.f32.mrf.mxu0
  %v335 = vadd.f32 %v266, %v334
  %v336 = vpop.f32.mrf.mxu0
  %337 = vmatprep.mubr.f32.mxu0 0.0
  %338 = vmatmul.mubr.f32.gmra.mxu0 %v78
  %v339 = vpop.f32.mrf.mxu0
  %v340 = vadd.f32 %v266, %v339
  %v341 = vpop.f32.mrf.mxu0
  %342 = vmatprep.mubr.f32.mxu0 0.0
  %343 = vmatmul.mubr.f32.gmra.mxu0 %v79
  %v344 = vpop.f32.mrf.mxu0
  %v345 = vadd.f32 %v266, %v344
  %v346 = vpop.f32.mrf.mxu0
  %347 = vmatprep.mubr.f32.mxu0 0.0
  %348 = vmatmul.mubr.f32.gmra.mxu0 %v80
  %v349 = vpop.f32.mrf.mxu0
  %v350 = vadd.f32 %v266, %v349
  %v351 = vpop.f32.mrf.mxu0
  %352 = vdwg.mxu0
  %353 = vmatprep.subr.mxu0 0.0
  %354 = vmatpush1.msra.mxu0 %v111
  %355 = vmatprep.subr.mxu0 0.0
  %356 = vmatpush1.msra.mxu0 %v110
  %357 = vmatprep.subr.mxu0 0.0
  %358 = vmatpush1.msra.mxu0 %v109
  %359 = vmatprep.subr.mxu0 0.0
  %360 = vmatpush1.msra.mxu0 %v108
  %361 = vmatprep.subr.mxu0 0.0
  %362 = vmatpush1.msra.mxu0 %v107
  %363 = vmatprep.subr.mxu0 0.0
  %364 = vmatpush1.msra.mxu0 %v106
  %365 = vmatprep.subr.mxu0 0.0
  %366 = vmatpush1.msra.mxu0 %v105
  %367 = vmatprep.subr.mxu0 0.0
  %368 = vmatpush1.msra.mxu0 %v104
  %369 = vmatprep.subr.mxu0 0.0
  %370 = vmatpush1.msra.mxu0 %v103
  %371 = vmatprep.subr.mxu0 0.0
  %372 = vmatpush1.msra.mxu0 %v102
  %373 = vmatprep.subr.mxu0 0.0
  %374 = vmatpush1.msra.mxu0 %v101
  %375 = vmatprep.subr.mxu0 0.0
  %376 = vmatpush1.msra.mxu0 %v100
  %377 = vmatprep.subr.mxu0 0.0
  %378 = vmatpush1.msra.mxu0 %v99
  %379 = vmatprep.subr.mxu0 0.0
  %380 = vmatpush1.msra.mxu0 %v98
  %381 = vmatprep.subr.mxu0 0.0
  %382 = vmatpush1.msra.mxu0 %v97
  %383 = vmatprep.subr.mxu0 0.0
  %384 = vmatpush1.msra.mxu0 %v96
  %385 = vmatprep.subr.mxu0 0.0
  %386 = vmatpush2.msra.mxu0 0.0
  %387 = vmatprep.subr.mxu0 0.0
  %388 = vmatpush2.msra.mxu0 0.0
  %389 = vmatprep.subr.mxu0 0.0
  %390 = vmatpush2.msra.mxu0 0.0
  %391 = vmatprep.subr.mxu0 0.0
  %392 = vmatpush2.msra.mxu0 0.0
  %393 = vmatprep.subr.mxu0 0.0
  %394 = vmatpush2.msra.mxu0 0.0
  %395 = vmatprep.subr.mxu0 0.0
  %396 = vmatpush2.msra.mxu0 0.0
  %397 = vmatprep.subr.mxu0 0.0
  %398 = vmatpush2.msra.mxu0 0.0
  %399 = vmatprep.subr.mxu0 0.0
  %400 = vmatpush2.msra.mxu0 0.0
  %401 = vmatprep.subr.mxu0 0.0
  %402 = vmatpush2.msra.mxu0 0.0
  %403 = vmatprep.subr.mxu0 0.0
  %404 = vmatpush2.msra.mxu0 0.0
  %405 = vmatprep.subr.mxu0 0.0
  %406 = vmatpush2.msra.mxu0 0.0
  %407 = vmatprep.subr.mxu0 0.0
  %408 = vmatpush2.msra.mxu0 0.0
  %409 = vmatprep.subr.mxu0 0.0
  %410 = vmatpush2.msra.mxu0 0.0
  %411 = vmatprep.subr.mxu0 0.0
  %412 = vmatpush2.msra.mxu0 0.0
  %413 = vmatprep.subr.mxu0 0.0
  %414 = vmatpush2.msra.mxu0 0.0
  %415 = vmatprep.subr.mxu0 0.0
  %416 = vmatpush2.msra.mxu0 0.0
  %417 = vmatprep.mubr.f32.mxu0 0.0
  %418 = vmatmul.mubr.f32.gmra.mxu0 %v243
  %v419 = vpop.f32.mrf.mxu0
  %v420 = vadd.f32 0.0, %v419
  %v421 = vpop.f32.mrf.mxu0
  %422 = vmatprep.mubr.f32.mxu0 0.0
  %423 = vmatmul.mubr.f32.gmra.mxu0 %v244
  %v424 = vpop.f32.mrf.mxu0
  %v425 = vadd.f32 0.0, %v424
  %v426 = vpop.f32.mrf.mxu0
  %427 = vdwg.mxu0
  %vm428 = vcmask 130048
  %v430 = vsel %vm428, %v85, 0
  %v433 = vsel %vm428, %v86, 0
  %v436 = vsel %vm428, %v87, 0
  %v439 = vsel %vm428, %v88, 0
  %441 = vmatprep.subr.mxu0 0.0
  %442 = vmatpush1.msra.mxu0 0.0
  %443 = vmatprep.subr.mxu0 0.0
  %444 = vmatpush1.msra.mxu0 0.0
  %445 = vmatprep.subr.mxu0 0.0
  %446 = vmatpush1.msra.mxu0 0.0
  %447 = vmatprep.subr.mxu0 0.0
  %448 = vmatpush1.msra.mxu0 0.0
  %449 = vmatprep.subr.mxu0 0.0
  %450 = vmatpush1.msra.mxu0 0.0
  %451 = vmatprep.subr.mxu0 0.0
  %452 = vmatpush1.msra.mxu0 0.0
  %453 = vmatprep.subr.mxu0 0.0
  %454 = vmatpush1.msra.mxu0 0.0
  %455 = vmatprep.subr.mxu0 0.0
  %456 = vmatpush1.msra.mxu0 0.0
  %457 = vmatprep.subr.mxu0 0.0
  %458 = vmatpush1.msra.mxu0 0.0
  %459 = vmatprep.subr.mxu0 0.0
  %460 = vmatpush1.msra.mxu0 0.0
  %461 = vmatprep.subr.mxu0 0.0
  %462 = vmatpush1.msra.mxu0 0.0
  %463 = vmatprep.subr.mxu0 0.0
  %464 = vmatpush1.msra.mxu0 0.0
  %465 = vmatprep.subr.mxu0 0.0
  %466 = vmatpush1.msra.mxu0 0.0
  %467 = vmatprep.subr.mxu0 0.0
  %468 = vmatpush1.msra.mxu0 0.0
  %469 = vmatprep.subr.mxu0 0.0
  %470 = vmatpush1.msra.mxu0 %v425
  %471 = vmatprep.subr.mxu0 0.0
  %472 = vmatpush1.msra.mxu0 %v420
  %473 = vmatprep.subr.mxu0 0.0
  %474 = vmatpush2.msra.mxu0 0.0
  %475 = vmatprep.subr.mxu0 0.0
  %476 = vmatpush2.msra.mxu0 0.0
  %477 = vmatprep.subr.mxu0 0.0
  %478 = vmatpush2.msra.mxu0 0.0
  %479 = vmatprep.subr.mxu0 0.0
  %480 = vmatpush2.msra.mxu0 0.0
  %481 = vmatprep.subr.mxu0 0.0
  %482 = vmatpush2.msra.mxu0 0.0
  %483 = vmatprep.subr.mxu0 0.0
  %484 = vmatpush2.msra.mxu0 0.0
  %485 = vmatprep.subr.mxu0 0.0
  %486 = vmatpush2.msra.mxu0 0.0
  %487 = vmatprep.subr.mxu0 0.0
  %488 = vmatpush2.msra.mxu0 0.0
  %489 = vmatprep.subr.mxu0 0.0
  %490 = vmatpush2.msra.mxu0 0.0
  %491 = vmatprep.subr.mxu0 0.0
  %492 = vmatpush2.msra.mxu0 0.0
  %493 = vmatprep.subr.mxu0 0.0
  %494 = vmatpush2.msra.mxu0 0.0
  %495 = vmatprep.subr.mxu0 0.0
  %496 = vmatpush2.msra.mxu0 0.0
  %497 = vmatprep.subr.mxu0 0.0
  %498 = vmatpush2.msra.mxu0 0.0
  %499 = vmatprep.subr.mxu0 0.0
  %500 = vmatpush2.msra.mxu0 0.0
  %501 = vmatprep.subr.mxu0 0.0
  %502 = vmatpush2.msra.mxu0 0.0
  %503 = vmatprep.subr.mxu0 0.0
  %504 = vmatpush2.msra.mxu0 0.0
  %505 = vmatprep.mubr.f32.mxu0 0.0
  %506 = vmatmul.mubr.f32.gmra.mxu0 %v430
  %v507 = vpop.f32.mrf.mxu0
  %v508 = vadd.f32 %v335, %v507
  %v509 = vpop.f32.mrf.mxu0
  %510 = vmatprep.mubr.f32.mxu0 0.0
  %511 = vmatmul.mubr.f32.gmra.mxu0 %v433
  %v512 = vpop.f32.mrf.mxu0
  %v513 = vadd.f32 %v340, %v512
  %v514 = vpop.f32.mrf.mxu0
  %515 = vmatprep.mubr.f32.mxu0 0.0
  %516 = vmatmul.mubr.f32.gmra.mxu0 %v436
  %v517 = vpop.f32.mrf.mxu0
  %v518 = vadd.f32 %v345, %v517
  %v519 = vpop.f32.mrf.mxu0
  %520 = vmatprep.mubr.f32.mxu0 0.0
  %521 = vmatmul.mubr.f32.gmra.mxu0 %v439
  %v522 = vpop.f32.mrf.mxu0
  %v523 = vadd.f32 %v350, %v522
  %v524 = vpop.f32.mrf.mxu0
  %525 = vdwg.mxu0
  %v526 = vmax.f32 %v508, 0.0
  %v527 = vmax.f32 %v513, 0.0
  %v528 = vmax.f32 %v518, 0.0
  %v529 = vmax.f32 %v523, 0.0
  %vm530 = vcmask 261120
  %v532 = vsel %vm530, %v91, 0
  %v535 = vsel %vm530, %v92, 0
  %537 = vmatprep.subr.mxu0 0.0
  %538 = vmatpush1.msra.mxu0 0.0
  %539 = vmatprep.subr.mxu0 0.0
  %540 = vmatpush1.msra.mxu0 0.0
  %541 = vmatprep.subr.mxu0 0.0
  %542 = vmatpush1.msra.mxu0 0.0
  %543 = vmatprep.subr.mxu0 0.0
  %544 = vmatpush1.msra.mxu0 0.0
  %545 = vmatprep.subr.mxu0 0.0
  %546 = vmatpush1.msra.mxu0 0.0
  %547 = vmatprep.subr.mxu0 0.0
  %548 = vmatpush1.msra.mxu0 0.0
  %549 = vmatprep.subr.mxu0 0.0
  %550 = vmatpush1.msra.mxu0 0.0
  %551 = vmatprep.subr.mxu0 0.0
  %552 = vmatpush1.msra.mxu0 0.0
  %553 = vmatprep.subr.mxu0 0.0
  %554 = vmatpush1.msra.mxu0 0.0
  %555 = vmatprep.subr.mxu0 0.0
  %556 = vmatpush1.msra.mxu0 0.0
  %557 = vmatprep.subr.mxu0 0.0
  %558 = vmatpush1.msra.mxu0 0.0
  %559 = vmatprep.subr.mxu0 0.0
  %560 = vmatpush1.msra.mxu0 0.0
  %561 = vmatprep.subr.mxu0 0.0
  %562 = vmatpush1.msra.mxu0 %v529
  %563 = vmatprep.subr.mxu0 0.0
  %564 = vmatpush1.msra.mxu0 %v528
  %565 = vmatprep.subr.mxu0 0.0
  %566 = vmatpush1.msra.mxu0 %v527
  %567 = vmatprep.subr.mxu0 0.0
  %568 = vmatpush1.msra.mxu0 %v526
  %569 = vmatprep.subr.mxu0 0.0
  %570 = vmatpush2.msra.mxu0 0.0
  %571 = vmatprep.subr.mxu0 0.0
  %572 = vmatpush2.msra.mxu0 0.0
  %573 = vmatprep.subr.mxu0 0.0
  %574 = vmatpush2.msra.mxu0 0.0
  %575 = vmatprep.subr.mxu0 0.0
  %576 = vmatpush2.msra.mxu0 0.0
  %577 = vmatprep.subr.mxu0 0.0
  %578 = vmatpush2.msra.mxu0 0.0
  %579 = vmatprep.subr.mxu0 0.0
  %580 = vmatpush2.msra.mxu0 0.0
  %581 = vmatprep.subr.mxu0 0.0
  %582 = vmatpush2.msra.mxu0 0.0
  %583 = vmatprep.subr.mxu0 0.0
  %584 = vmatpush2.msra.mxu0 0.0
  %585 = vmatprep.subr.mxu0 0.0
  %586 = vmatpush2.msra.mxu0 0.0
  %587 = vmatprep.subr.mxu0 0.0
  %588 = vmatpush2.msra.mxu0 0.0
  %589 = vmatprep.subr.mxu0 0.0
  %590 = vmatpush2.msra.mxu0 0.0
  %591 = vmatprep.subr.mxu0 0.0
  %592 = vmatpush2.msra.mxu0 0.0
  %593 = vmatprep.subr.mxu0 0.0
  %594 = vmatpush2.msra.mxu0 0.0
  %595 = vmatprep.subr.mxu0 0.0
  %596 = vmatpush2.msra.mxu0 0.0
  %597 = vmatprep.subr.mxu0 0.0
  %598 = vmatpush2.msra.mxu0 0.0
  %599 = vmatprep.subr.mxu0 0.0
  %600 = vmatpush2.msra.mxu0 0.0
  %601 = vmatprep.mubr.f32.mxu0 0.0
  %602 = vmatmul.mubr.f32.gmra.mxu0 %v532
  %v603 = vpop.f32.mrf.mxu0
  %v604 = vadd.f32 0.0, %v603
  %v605 = vpop.f32.mrf.mxu0
  %606 = vmatprep.mubr.f32.mxu0 0.0
  %607 = vmatmul.mubr.f32.gmra.mxu0 %v535
  %v608 = vpop.f32.mrf.mxu0
  %v609 = vadd.f32 0.0, %v608
  %v610 = vpop.f32.mrf.mxu0
  %611 = vdwg.mxu0
  %612 = vmatprep.subr.mxu0 0.0
  %613 = vmatpush1.msra.mxu0 %v143
  %614 = vmatprep.subr.mxu0 0.0
  %615 = vmatpush1.msra.mxu0 %v142
  %616 = vmatprep.subr.mxu0 0.0
  %617 = vmatpush1.msra.mxu0 %v141
  %618 = vmatprep.subr.mxu0 0.0
  %619 = vmatpush1.msra.mxu0 %v140
  %620 = vmatprep.subr.mxu0 0.0
  %621 = vmatpush1.msra.mxu0 %v139
  %622 = vmatprep.subr.mxu0 0.0
  %623 = vmatpush1.msra.mxu0 %v138
  %624 = vmatprep.subr.mxu0 0.0
  %625 = vmatpush1.msra.mxu0 %v137
  %626 = vmatprep.subr.mxu0 0.0
  %627 = vmatpush1.msra.mxu0 %v136
  %628 = vmatprep.subr.mxu0 0.0
  %629 = vmatpush1.msra.mxu0 %v135
  %630 = vmatprep.subr.mxu0 0.0
  %631 = vmatpush1.msra.mxu0 %v134
  %632 = vmatprep.subr.mxu0 0.0
  %633 = vmatpush1.msra.mxu0 %v133
  %634 = vmatprep.subr.mxu0 0.0
  %635 = vmatpush1.msra.mxu0 %v132
  %636 = vmatprep.subr.mxu0 0.0
  %637 = vmatpush1.msra.mxu0 %v131
  %638 = vmatprep.subr.mxu0 0.0
  %639 = vmatpush1.msra.mxu0 %v130
  %640 = vmatprep.subr.mxu0 0.0
  %641 = vmatpush1.msra.mxu0 %v129
  %642 = vmatprep.subr.mxu0 0.0
  %643 = vmatpush1.msra.mxu0 %v128
  %644 = vmatprep.subr.mxu0 0.0
  %645 = vmatpush2.msra.mxu0 0.0
  %646 = vmatprep.subr.mxu0 0.0
  %647 = vmatpush2.msra.mxu0 0.0
  %648 = vmatprep.subr.mxu0 0.0
  %649 = vmatpush2.msra.mxu0 0.0
  %650 = vmatprep.subr.mxu0 0.0
  %651 = vmatpush2.msra.mxu0 0.0
  %652 = vmatprep.subr.mxu0 0.0
  %653 = vmatpush2.msra.mxu0 0.0
  %654 = vmatprep.subr.mxu0 0.0
  %655 = vmatpush2.msra.mxu0 0.0
  %656 = vmatprep.subr.mxu0 0.0
  %657 = vmatpush2.msra.mxu0 0.0
  %658 = vmatprep.subr.mxu0 0.0
  %659 = vmatpush2.msra.mxu0 0.0
  %660 = vmatprep.subr.mxu0 0.0
  %661 = vmatpush2.msra.mxu0 0.0
  %662 = vmatprep.subr.mxu0 0.0
  %663 = vmatpush2.msra.mxu0 0.0
  %664 = vmatprep.subr.mxu0 0.0
  %665 = vmatpush2.msra.mxu0 0.0
  %666 = vmatprep.subr.mxu0 0.0
  %667 = vmatpush2.msra.mxu0 0.0
  %668 = vmatprep.subr.mxu0 0.0
  %669 = vmatpush2.msra.mxu0 0.0
  %670 = vmatprep.subr.mxu0 0.0
  %671 = vmatpush2.msra.mxu0 0.0
  %672 = vmatprep.subr.mxu0 0.0
  %673 = vmatpush2.msra.mxu0 0.0
  %674 = vmatprep.subr.mxu0 0.0
  %675 = vmatpush2.msra.mxu0 0.0
  %676 = vmatprep.mubr.f32.mxu0 0.0
  %677 = vmatmul.mubr.f32.gmra.mxu0 %v604
  %v678 = vpop.f32.mrf.mxu0
  %v679 = vadd.f32 0.0, %v678
  %v680 = vpop.f32.mrf.mxu0
  %681 = vmatprep.mubr.f32.mxu0 0.0
  %682 = vmatmul.mubr.f32.gmra.mxu0 %v609
  %v683 = vpop.f32.mrf.mxu0
  %v684 = vadd.f32 0.0, %v683
  %v685 = vpop.f32.mrf.mxu0
  %686 = vdwg.mxu0
  %687 = vmatprep.subr.mxu0 0.0
  %688 = vmatpush1.msra.mxu0 %v127
  %689 = vmatprep.subr.mxu0 0.0
  %690 = vmatpush1.msra.mxu0 %v126
  %691 = vmatprep.subr.mxu0 0.0
  %692 = vmatpush1.msra.mxu0 %v125
  %693 = vmatprep.subr.mxu0 0.0
  %694 = vmatpush1.msra.mxu0 %v124
  %695 = vmatprep.subr.mxu0 0.0
  %696 = vmatpush1.msra.mxu0 %v123
  %697 = vmatprep.subr.mxu0 0.0
  %698 = vmatpush1.msra.mxu0 %v122
  %699 = vmatprep.subr.mxu0 0.0
  %700 = vmatpush1.msra.mxu0 %v121
  %701 = vmatprep.subr.mxu0 0.0
  %702 = vmatpush1.msra.mxu0 %v120
  %703 = vmatprep.subr.mxu0 0.0
  %704 = vmatpush1.msra.mxu0 %v119
  %705 = vmatprep.subr.mxu0 0.0
  %706 = vmatpush1.msra.mxu0 %v118
  %707 = vmatprep.subr.mxu0 0.0
  %708 = vmatpush1.msra.mxu0 %v117
  %709 = vmatprep.subr.mxu0 0.0
  %710 = vmatpush1.msra.mxu0 %v116
  %711 = vmatprep.subr.mxu0 0.0
  %712 = vmatpush1.msra.mxu0 %v115
  %713 = vmatprep.subr.mxu0 0.0
  %714 = vmatpush1.msra.mxu0 %v114
  %715 = vmatprep.subr.mxu0 0.0
  %716 = vmatpush1.msra.mxu0 %v113
  %717 = vmatprep.subr.mxu0 0.0
  %718 = vmatpush1.msra.mxu0 %v112
  %719 = vmatprep.subr.mxu0 0.0
  %720 = vmatpush2.msra.mxu0 0.0
  %721 = vmatprep.subr.mxu0 0.0
  %722 = vmatpush2.msra.mxu0 0.0
  %723 = vmatprep.subr.mxu0 0.0
  %724 = vmatpush2.msra.mxu0 0.0
  %725 = vmatprep.subr.mxu0 0.0
  %726 = vmatpush2.msra.mxu0 0.0
  %727 = vmatprep.subr.mxu0 0.0
  %728 = vmatpush2.msra.mxu0 0.0
  %729 = vmatprep.subr.mxu0 0.0
  %730 = vmatpush2.msra.mxu0 0.0
  %731 = vmatprep.subr.mxu0 0.0
  %732 = vmatpush2.msra.mxu0 0.0
  %733 = vmatprep.subr.mxu0 0.0
  %734 = vmatpush2.msra.mxu0 0.0
  %735 = vmatprep.subr.mxu0 0.0
  %736 = vmatpush2.msra.mxu0 0.0
  %737 = vmatprep.subr.mxu0 0.0
  %738 = vmatpush2.msra.mxu0 0.0
  %739 = vmatprep.subr.mxu0 0.0
  %740 = vmatpush2.msra.mxu0 0.0
  %741 = vmatprep.subr.mxu0 0.0
  %742 = vmatpush2.msra.mxu0 0.0
  %743 = vmatprep.subr.mxu0 0.0
  %744 = vmatpush2.msra.mxu0 0.0
  %745 = vmatprep.subr.mxu0 0.0
  %746 = vmatpush2.msra.mxu0 0.0
  %747 = vmatprep.subr.mxu0 0.0
  %748 = vmatpush2.msra.mxu0 0.0
  %749 = vmatprep.subr.mxu0 0.0
  %750 = vmatpush2.msra.mxu0 0.0
  %751 = vmatprep.mubr.f32.mxu0 0.0
  %752 = vmatmul.mubr.f32.gmra.mxu0 %v243
  %v753 = vpop.f32.mrf.mxu0
  %v754 = vadd.f32 %v679, %v753
  %v755 = vpop.f32.mrf.mxu0
  %756 = vmatprep.mubr.f32.mxu0 0.0
  %757 = vmatmul.mubr.f32.gmra.mxu0 %v244
  %v758 = vpop.f32.mrf.mxu0
  %v759 = vadd.f32 %v684, %v758
  %v760 = vpop.f32.mrf.mxu0
  %761 = vdwg.mxu0
  %v763 = vlaneseq
  %v764 = vshrl.u32 %v763, 7
  %v765 = vsub.s32 0, %v764
  %v766 = vrot.slane %v144, %v765
  %v768 = vadd.f32 %v754, %v766
  %v769 = vadd.f32 %v759, %v766
  %v770 = vmax.f32 %v768, 0.0
  %v771 = vmax.f32 %v769, 0.0
  %772 = vmatprep.subr.mxu0 0.0
  %773 = vmatpush1.msra.mxu0 %v111
  %774 = vmatprep.subr.mxu0 0.0
  %775 = vmatpush1.msra.mxu0 %v110
  %776 = vmatprep.subr.mxu0 0.0
  %777 = vmatpush1.msra.mxu0 %v109
  %778 = vmatprep.subr.mxu0 0.0
  %779 = vmatpush1.msra.mxu0 %v108
  %780 = vmatprep.subr.mxu0 0.0
  %781 = vmatpush1.msra.mxu0 %v107
  %782 = vmatprep.subr.mxu0 0.0
  %783 = vmatpush1.msra.mxu0 %v106
  %784 = vmatprep.subr.mxu0 0.0
  %785 = vmatpush1.msra.mxu0 %v105
  %786 = vmatprep.subr.mxu0 0.0
  %787 = vmatpush1.msra.mxu0 %v104
  %788 = vmatprep.subr.mxu0 0.0
  %789 = vmatpush1.msra.mxu0 %v103
  %790 = vmatprep.subr.mxu0 0.0
  %791 = vmatpush1.msra.mxu0 %v102
  %792 = vmatprep.subr.mxu0 0.0
  %793 = vmatpush1.msra.mxu0 %v101
  %794 = vmatprep.subr.mxu0 0.0
  %795 = vmatpush1.msra.mxu0 %v100
  %796 = vmatprep.subr.mxu0 0.0
  %797 = vmatpush1.msra.mxu0 %v99
  %798 = vmatprep.subr.mxu0 0.0
  %799 = vmatpush1.msra.mxu0 %v98
  %800 = vmatprep.subr.mxu0 0.0
  %801 = vmatpush1.msra.mxu0 %v97
  %802 = vmatprep.subr.mxu0 0.0
  %803 = vmatpush1.msra.mxu0 %v96
  %804 = vmatprep.subr.mxu0 0.0
  %805 = vmatpush2.msra.mxu0 0.0
  %806 = vmatprep.subr.mxu0 0.0
  %807 = vmatpush2.msra.mxu0 0.0
  %808 = vmatprep.subr.mxu0 0.0
  %809 = vmatpush2.msra.mxu0 0.0
  %810 = vmatprep.subr.mxu0 0.0
  %811 = vmatpush2.msra.mxu0 0.0
  %812 = vmatprep.subr.mxu0 0.0
  %813 = vmatpush2.msra.mxu0 0.0
  %814 = vmatprep.subr.mxu0 0.0
  %815 = vmatpush2.msra.mxu0 0.0
  %816 = vmatprep.subr.mxu0 0.0
  %817 = vmatpush2.msra.mxu0 0.0
  %818 = vmatprep.subr.mxu0 0.0
  %819 = vmatpush2.msra.mxu0 0.0
  %820 = vmatprep.subr.mxu0 0.0
  %821 = vmatpush2.msra.mxu0 0.0
  %822 = vmatprep.subr.mxu0 0.0
  %823 = vmatpush2.msra.mxu0 0.0
  %824 = vmatprep.subr.mxu0 0.0
  %825 = vmatpush2.msra.mxu0 0.0
  %826 = vmatprep.subr.mxu0 0.0
  %827 = vmatpush2.msra.mxu0 0.0
  %828 = vmatprep.subr.mxu0 0.0
  %829 = vmatpush2.msra.mxu0 0.0
  %830 = vmatprep.subr.mxu0 0.0
  %831 = vmatpush2.msra.mxu0 0.0
  %832 = vmatprep.subr.mxu0 0.0
  %833 = vmatpush2.msra.mxu0 0.0
  %834 = vmatprep.subr.mxu0 0.0
  %835 = vmatpush2.msra.mxu0 0.0
  %836 = vmatprep.mubr.f32.mxu0 0.0
  %837 = vmatmul.mubr.f32.gmra.mxu0 %v770
  %v838 = vpop.f32.mrf.mxu0
  %v839 = vadd.f32 0.0, %v838
  %v840 = vpop.f32.mrf.mxu0
  %841 = vmatprep.mubr.f32.mxu0 0.0
  %842 = vmatmul.mubr.f32.gmra.mxu0 %v771
  %v843 = vpop.f32.mrf.mxu0
  %v844 = vadd.f32 0.0, %v843
  %v845 = vpop.f32.mrf.mxu0
  %846 = vdwg.mxu0
  %847 = vmatprep.subr.mxu0 0.0
  %848 = vmatpush1.msra.mxu0 0.0
  %849 = vmatprep.subr.mxu0 0.0
  %850 = vmatpush1.msra.mxu0 0.0
  %851 = vmatprep.subr.mxu0 0.0
  %852 = vmatpush1.msra.mxu0 0.0
  %853 = vmatprep.subr.mxu0 0.0
  %854 = vmatpush1.msra.mxu0 0.0
  %855 = vmatprep.subr.mxu0 0.0
  %856 = vmatpush1.msra.mxu0 0.0
  %857 = vmatprep.subr.mxu0 0.0
  %858 = vmatpush1.msra.mxu0 0.0
  %859 = vmatprep.subr.mxu0 0.0
  %860 = vmatpush1.msra.mxu0 0.0
  %861 = vmatprep.subr.mxu0 0.0
  %862 = vmatpush1.msra.mxu0 0.0
  %863 = vmatprep.subr.mxu0 0.0
  %864 = vmatpush1.msra.mxu0 0.0
  %865 = vmatprep.subr.mxu0 0.0
  %866 = vmatpush1.msra.mxu0 0.0
  %867 = vmatprep.subr.mxu0 0.0
  %868 = vmatpush1.msra.mxu0 0.0
  %869 = vmatprep.subr.mxu0 0.0
  %870 = vmatpush1.msra.mxu0 0.0
  %871 = vmatprep.subr.mxu0 0.0
  %872 = vmatpush1.msra.mxu0 0.0
  %873 = vmatprep.subr.mxu0 0.0
  %874 = vmatpush1.msra.mxu0 0.0
  %875 = vmatprep.subr.mxu0 0.0
  %876 = vmatpush1.msra.mxu0 %v844
  %877 = vmatprep.subr.mxu0 0.0
  %878 = vmatpush1.msra.mxu0 %v839
  %879 = vmatprep.subr.mxu0 0.0
  %880 = vmatpush2.msra.mxu0 0.0
  %881 = vmatprep.subr.mxu0 0.0
  %882 = vmatpush2.msra.mxu0 0.0
  %883 = vmatprep.subr.mxu0 0.0
  %884 = vmatpush2.msra.mxu0 0.0
  %885 = vmatprep.subr.mxu0 0.0
  %886 = vmatpush2.msra.mxu0 0.0
  %887 = vmatprep.subr.mxu0 0.0
  %888 = vmatpush2.msra.mxu0 0.0
  %889 = vmatprep.subr.mxu0 0.0
  %890 = vmatpush2.msra.mxu0 0.0
  %891 = vmatprep.subr.mxu0 0.0
  %892 = vmatpush2.msra.mxu0 0.0
  %893 = vmatprep.subr.mxu0 0.0
  %894 = vmatpush2.msra.mxu0 0.0
  %895 = vmatprep.subr.mxu0 0.0
  %896 = vmatpush2.msra.mxu0 0.0
  %897 = vmatprep.subr.mxu0 0.0
  %898 = vmatpush2.msra.mxu0 0.0
  %899 = vmatprep.subr.mxu0 0.0
  %900 = vmatpush2.msra.mxu0 0.0
  %901 = vmatprep.subr.mxu0 0.0
  %902 = vmatpush2.msra.mxu0 0.0
  %903 = vmatprep.subr.mxu0 0.0
  %904 = vmatpush2.msra.mxu0 0.0
  %905 = vmatprep.subr.mxu0 0.0
  %906 = vmatpush2.msra.mxu0 0.0
  %907 = vmatprep.subr.mxu0 0.0
  %908 = vmatpush2.msra.mxu0 0.0
  %909 = vmatprep.subr.mxu0 0.0
  %910 = vmatpush2.msra.mxu0 0.0
  %911 = vmatprep.mubr.f32.mxu0 0.0
  %912 = vmatmul.mubr.f32.gmra.mxu0 %v430
  %v913 = vpop.f32.mrf.mxu0
  %v914 = vadd.f32 %v335, %v913
  %v915 = vpop.f32.mrf.mxu0
  %916 = vmatprep.mubr.f32.mxu0 0.0
  %917 = vmatmul.mubr.f32.gmra.mxu0 %v433
  %v918 = vpop.f32.mrf.mxu0
  %v919 = vadd.f32 %v340, %v918
  %v920 = vpop.f32.mrf.mxu0
  %921 = vmatprep.mubr.f32.mxu0 0.0
  %922 = vmatmul.mubr.f32.gmra.mxu0 %v436
  %v923 = vpop.f32.mrf.mxu0
  %v924 = vadd.f32 %v345, %v923
  %v925 = vpop.f32.mrf.mxu0
  %926 = vmatprep.mubr.f32.mxu0 0.0
  %927 = vmatmul.mubr.f32.gmra.mxu0 %v439
  %v928 = vpop.f32.mrf.mxu0
  %v929 = vadd.f32 %v350, %v928
  %v930 = vpop.f32.mrf.mxu0
  %931 = vdwg.mxu0
  %v932 = vmax.f32 %v914, 0.0
  %v933 = vmax.f32 %v919, 0.0
  %v934 = vmax.f32 %v924, 0.0
  %v935 = vmax.f32 %v929, 0.0
  %936 = vmatprep.subr.mxu0 0.0
  %937 = vmatpush1.msra.mxu0 0.0
  %938 = vmatprep.subr.mxu0 0.0
  %939 = vmatpush1.msra.mxu0 0.0
  %940 = vmatprep.subr.mxu0 0.0
  %941 = vmatpush1.msra.mxu0 0.0
  %942 = vmatprep.subr.mxu0 0.0
  %943 = vmatpush1.msra.mxu0 0.0
  %944 = vmatprep.subr.mxu0 0.0
  %945 = vmatpush1.msra.mxu0 0.0
  %946 = vmatprep.subr.mxu0 0.0
  %947 = vmatpush1.msra.mxu0 0.0
  %948 = vmatprep.subr.mxu0 0.0
  %949 = vmatpush1.msra.mxu0 0.0
  %950 = vmatprep.subr.mxu0 0.0
  %951 = vmatpush1.msra.mxu0 0.0
  %952 = vmatprep.subr.mxu0 0.0
  %953 = vmatpush1.msra.mxu0 0.0
  %954 = vmatprep.subr.mxu0 0.0
  %955 = vmatpush1.msra.mxu0 0.0
  %956 = vmatprep.subr.mxu0 0.0
  %957 = vmatpush1.msra.mxu0 0.0
  %958 = vmatprep.subr.mxu0 0.0
  %959 = vmatpush1.msra.mxu0 0.0
  %960 = vmatprep.subr.mxu0 0.0
  %961 = vmatpush1.msra.mxu0 %v935
  %962 = vmatprep.subr.mxu0 0.0
  %963 = vmatpush1.msra.mxu0 %v934
  %964 = vmatprep.subr.mxu0 0.0
  %965 = vmatpush1.msra.mxu0 %v933
  %966 = vmatprep.subr.mxu0 0.0
  %967 = vmatpush1.msra.mxu0 %v932
  %968 = vmatprep.subr.mxu0 0.0
  %969 = vmatpush2.msra.mxu0 0.0
  %970 = vmatprep.subr.mxu0 0.0
  %971 = vmatpush2.msra.mxu0 0.0
  %972 = vmatprep.subr.mxu0 0.0
  %973 = vmatpush2.msra.mxu0 0.0
  %974 = vmatprep.subr.mxu0 0.0
  %975 = vmatpush2.msra.mxu0 0.0
  %976 = vmatprep.subr.mxu0 0.0
  %977 = vmatpush2.msra.mxu0 0.0
  %978 = vmatprep.subr.mxu0 0.0
  %979 = vmatpush2.msra.mxu0 0.0
  %980 = vmatprep.subr.mxu0 0.0
  %981 = vmatpush2.msra.mxu0 0.0
  %982 = vmatprep.subr.mxu0 0.0
  %983 = vmatpush2.msra.mxu0 0.0
  %984 = vmatprep.subr.mxu0 0.0
  %985 = vmatpush2.msra.mxu0 0.0
  %986 = vmatprep.subr.mxu0 0.0
  %987 = vmatpush2.msra.mxu0 0.0
  %988 = vmatprep.subr.mxu0 0.0
  %989 = vmatpush2.msra.mxu0 0.0
  %990 = vmatprep.subr.mxu0 0.0
  %991 = vmatpush2.msra.mxu0 0.0
  %992 = vmatprep.subr.mxu0 0.0
  %993 = vmatpush2.msra.mxu0 0.0
  %994 = vmatprep.subr.mxu0 0.0
  %995 = vmatpush2.msra.mxu0 0.0
  %996 = vmatprep.subr.mxu0 0.0
  %997 = vmatpush2.msra.mxu0 0.0
  %998 = vmatprep.subr.mxu0 0.0
  %999 = vmatpush2.msra.mxu0 0.0
  %1000 = vmatprep.mubr.f32.mxu0 0.0
  %1001 = vmatmul.mubr.f32.gmra.mxu0 %v532
  %v1002 = vpop.f32.mrf.mxu0
  %v1003 = vadd.f32 0.0, %v1002
  %v1004 = vpop.f32.mrf.mxu0
  %1005 = vmatprep.mubr.f32.mxu0 0.0
  %1006 = vmatmul.mubr.f32.gmra.mxu0 %v535
  %v1007 = vpop.f32.mrf.mxu0
  %v1008 = vadd.f32 0.0, %v1007
  %v1009 = vpop.f32.mrf.mxu0
  %1010 = vdwg.mxu0
  %1011 = vmatprep.subr.mxu0 0.0
  %1012 = vmatpush1.msra.mxu0 %v143
  %1013 = vmatprep.subr.mxu0 0.0
  %1014 = vmatpush1.msra.mxu0 %v142
  %1015 = vmatprep.subr.mxu0 0.0
  %1016 = vmatpush1.msra.mxu0 %v141
  %1017 = vmatprep.subr.mxu0 0.0
  %1018 = vmatpush1.msra.mxu0 %v140
  %1019 = vmatprep.subr.mxu0 0.0
  %1020 = vmatpush1.msra.mxu0 %v139
  %1021 = vmatprep.subr.mxu0 0.0
  %1022 = vmatpush1.msra.mxu0 %v138
  %1023 = vmatprep.subr.mxu0 0.0
  %1024 = vmatpush1.msra.mxu0 %v137
  %1025 = vmatprep.subr.mxu0 0.0
  %1026 = vmatpush1.msra.mxu0 %v136
  %1027 = vmatprep.subr.mxu0 0.0
  %1028 = vmatpush1.msra.mxu0 %v135
  %1029 = vmatprep.subr.mxu0 0.0
  %1030 = vmatpush1.msra.mxu0 %v134
  %1031 = vmatprep.subr.mxu0 0.0
  %1032 = vmatpush1.msra.mxu0 %v133
  %1033 = vmatprep.subr.mxu0 0.0
  %1034 = vmatpush1.msra.mxu0 %v132
  %1035 = vmatprep.subr.mxu0 0.0
  %1036 = vmatpush1.msra.mxu0 %v131
  %1037 = vmatprep.subr.mxu0 0.0
  %1038 = vmatpush1.msra.mxu0 %v130
  %1039 = vmatprep.subr.mxu0 0.0
  %1040 = vmatpush1.msra.mxu0 %v129
  %1041 = vmatprep.subr.mxu0 0.0
  %1042 = vmatpush1.msra.mxu0 %v128
  %1043 = vmatprep.subr.mxu0 0.0
  %1044 = vmatpush2.msra.mxu0 0.0
  %1045 = vmatprep.subr.mxu0 0.0
  %1046 = vmatpush2.msra.mxu0 0.0
  %1047 = vmatprep.subr.mxu0 0.0
  %1048 = vmatpush2.msra.mxu0 0.0
  %1049 = vmatprep.subr.mxu0 0.0
  %1050 = vmatpush2.msra.mxu0 0.0
  %1051 = vmatprep.subr.mxu0 0.0
  %1052 = vmatpush2.msra.mxu0 0.0
  %1053 = vmatprep.subr.mxu0 0.0
  %1054 = vmatpush2.msra.mxu0 0.0
  %1055 = vmatprep.subr.mxu0 0.0
  %1056 = vmatpush2.msra.mxu0 0.0
  %1057 = vmatprep.subr.mxu0 0.0
  %1058 = vmatpush2.msra.mxu0 0.0
  %1059 = vmatprep.subr.mxu0 0.0
  %1060 = vmatpush2.msra.mxu0 0.0
  %1061 = vmatprep.subr.mxu0 0.0
  %1062 = vmatpush2.msra.mxu0 0.0
  %1063 = vmatprep.subr.mxu0 0.0
  %1064 = vmatpush2.msra.mxu0 0.0
  %1065 = vmatprep.subr.mxu0 0.0
  %1066 = vmatpush2.msra.mxu0 0.0
  %1067 = vmatprep.subr.mxu0 0.0
  %1068 = vmatpush2.msra.mxu0 0.0
  %1069 = vmatprep.subr.mxu0 0.0
  %1070 = vmatpush2.msra.mxu0 0.0
  %1071 = vmatprep.subr.mxu0 0.0
  %1072 = vmatpush2.msra.mxu0 0.0
  %1073 = vmatprep.subr.mxu0 0.0
  %1074 = vmatpush2.msra.mxu0 0.0
  %1075 = vmatprep.mubr.f32.mxu0 0.0
  %1076 = vmatmul.mubr.f32.gmra.mxu0 %v1003
  %v1077 = vpop.f32.mrf.mxu0
  %v1078 = vadd.f32 0.0, %v1077
  %v1079 = vpop.f32.mrf.mxu0
  %1080 = vmatprep.mubr.f32.mxu0 0.0
  %1081 = vmatmul.mubr.f32.gmra.mxu0 %v1008
  %v1082 = vpop.f32.mrf.mxu0
  %v1083 = vadd.f32 0.0, %v1082
  %v1084 = vpop.f32.mrf.mxu0
  %1085 = vdwg.mxu0
  %1086 = vmatprep.subr.mxu0 0.0
  %1087 = vmatpush1.msra.mxu0 %v127
  %1088 = vmatprep.subr.mxu0 0.0
  %1089 = vmatpush1.msra.mxu0 %v126
  %1090 = vmatprep.subr.mxu0 0.0
  %1091 = vmatpush1.msra.mxu0 %v125
  %1092 = vmatprep.subr.mxu0 0.0
  %1093 = vmatpush1.msra.mxu0 %v124
  %1094 = vmatprep.subr.mxu0 0.0
  %1095 = vmatpush1.msra.mxu0 %v123
  %1096 = vmatprep.subr.mxu0 0.0
  %1097 = vmatpush1.msra.mxu0 %v122
  %1098 = vmatprep.subr.mxu0 0.0
  %1099 = vmatpush1.msra.mxu0 %v121
  %1100 = vmatprep.subr.mxu0 0.0
  %1101 = vmatpush1.msra.mxu0 %v120
  %1102 = vmatprep.subr.mxu0 0.0
  %1103 = vmatpush1.msra.mxu0 %v119
  %1104 = vmatprep.subr.mxu0 0.0
  %1105 = vmatpush1.msra.mxu0 %v118
  %1106 = vmatprep.subr.mxu0 0.0
  %1107 = vmatpush1.msra.mxu0 %v117
  %1108 = vmatprep.subr.mxu0 0.0
  %1109 = vmatpush1.msra.mxu0 %v116
  %1110 = vmatprep.subr.mxu0 0.0
  %1111 = vmatpush1.msra.mxu0 %v115
  %1112 = vmatprep.subr.mxu0 0.0
  %1113 = vmatpush1.msra.mxu0 %v114
  %1114 = vmatprep.subr.mxu0 0.0
  %1115 = vmatpush1.msra.mxu0 %v113
  %1116 = vmatprep.subr.mxu0 0.0
  %1117 = vmatpush1.msra.mxu0 %v112
  %1118 = vmatprep.subr.mxu0 0.0
  %1119 = vmatpush2.msra.mxu0 0.0
  %1120 = vmatprep.subr.mxu0 0.0
  %1121 = vmatpush2.msra.mxu0 0.0
  %1122 = vmatprep.subr.mxu0 0.0
  %1123 = vmatpush2.msra.mxu0 0.0
  %1124 = vmatprep.subr.mxu0 0.0
  %1125 = vmatpush2.msra.mxu0 0.0
  %1126 = vmatprep.subr.mxu0 0.0
  %1127 = vmatpush2.msra.mxu0 0.0
  %1128 = vmatprep.subr.mxu0 0.0
  %1129 = vmatpush2.msra.mxu0 0.0
  %1130 = vmatprep.subr.mxu0 0.0
  %1131 = vmatpush2.msra.mxu0 0.0
  %1132 = vmatprep.subr.mxu0 0.0
  %1133 = vmatpush2.msra.mxu0 0.0
  %1134 = vmatprep.subr.mxu0 0.0
  %1135 = vmatpush2.msra.mxu0 0.0
  %1136 = vmatprep.subr.mxu0 0.0
  %1137 = vmatpush2.msra.mxu0 0.0
  %1138 = vmatprep.subr.mxu0 0.0
  %1139 = vmatpush2.msra.mxu0 0.0
  %1140 = vmatprep.subr.mxu0 0.0
  %1141 = vmatpush2.msra.mxu0 0.0
  %1142 = vmatprep.subr.mxu0 0.0
  %1143 = vmatpush2.msra.mxu0 0.0
  %1144 = vmatprep.subr.mxu0 0.0
  %1145 = vmatpush2.msra.mxu0 0.0
  %1146 = vmatprep.subr.mxu0 0.0
  %1147 = vmatpush2.msra.mxu0 0.0
  %1148 = vmatprep.subr.mxu0 0.0
  %1149 = vmatpush2.msra.mxu0 0.0
  %1150 = vmatprep.mubr.f32.mxu0 0.0
  %1151 = vmatmul.mubr.f32.gmra.mxu0 %v770
  %v1152 = vpop.f32.mrf.mxu0
  %v1153 = vadd.f32 %v1078, %v1152
  %v1154 = vpop.f32.mrf.mxu0
  %1155 = vmatprep.mubr.f32.mxu0 0.0
  %1156 = vmatmul.mubr.f32.gmra.mxu0 %v771
  %v1157 = vpop.f32.mrf.mxu0
  %v1158 = vadd.f32 %v1083, %v1157
  %v1159 = vpop.f32.mrf.mxu0
  %1160 = vdwg.mxu0
  %v1161 = vadd.f32 %v1153, %v766
  %v1162 = vadd.f32 %v1158, %v766
  %v1163 = vmax.f32 %v1161, 0.0
  %v1164 = vmax.f32 %v1162, 0.0
  %v1165 = vld [vmem:[%s14] sm:$0xff]
  %v1166 = vld [vmem:[%s14 + $0x8] sm:$0xff]
  %v1167 = vld [vmem:[%s14 + $0x10] sm:$0xff]
  %v1168 = vld [vmem:[%s14 + $0x18] sm:$0xff]
  %v1169 = vld [vmem:[%s14 + $0x20] sm:$0xff]
  %v1170 = vld [vmem:[%s14 + $0x28] sm:$0xff]
  %v1171 = vld [vmem:[%s14 + $0x30] sm:$0xff]
  %v1172 = vld [vmem:[%s14 + $0x38] sm:$0xff]
  %v1173 = vld [vmem:[%s14 + $0x40] sm:$0xff]
  %v1174 = vld [vmem:[%s14 + $0x48] sm:$0xff]
  %v1175 = vld [vmem:[%s14 + $0x50] sm:$0xff]
  %v1176 = vld [vmem:[%s14 + $0x58] sm:$0xff]
  %v1177 = vld [vmem:[%s14 + $0x60] sm:$0xff]
  %v1178 = vld [vmem:[%s14 + $0x68] sm:$0xff]
  %v1179 = vld [vmem:[%s14 + $0x70] sm:$0xff]
  %v1180 = vld [vmem:[%s14 + $0x78] sm:$0xff]
  %1181 = vmatprep.subr.mxu0 0.0
  %1182 = vmatpush1.msra.mxu0 %v1180
  %1183 = vmatprep.subr.mxu0 0.0
  %1184 = vmatpush1.msra.mxu0 %v1179
  %1185 = vmatprep.subr.mxu0 0.0
  %1186 = vmatpush1.msra.mxu0 %v1178
  %1187 = vmatprep.subr.mxu0 0.0
  %1188 = vmatpush1.msra.mxu0 %v1177
  %1189 = vmatprep.subr.mxu0 0.0
  %1190 = vmatpush1.msra.mxu0 %v1176
  %1191 = vmatprep.subr.mxu0 0.0
  %1192 = vmatpush1.msra.mxu0 %v1175
  %1193 = vmatprep.subr.mxu0 0.0
  %1194 = vmatpush1.msra.mxu0 %v1174
  %1195 = vmatprep.subr.mxu0 0.0
  %1196 = vmatpush1.msra.mxu0 %v1173
  %1197 = vmatprep.subr.mxu0 0.0
  %1198 = vmatpush1.msra.mxu0 %v1172
  %1199 = vmatprep.subr.mxu0 0.0
  %1200 = vmatpush1.msra.mxu0 %v1171
  %1201 = vmatprep.subr.mxu0 0.0
  %1202 = vmatpush1.msra.mxu0 %v1170
  %1203 = vmatprep.subr.mxu0 0.0
  %1204 = vmatpush1.msra.mxu0 %v1169
  %1205 = vmatprep.subr.mxu0 0.0
  %1206 = vmatpush1.msra.mxu0 %v1168
  %1207 = vmatprep.subr.mxu0 0.0
  %1208 = vmatpush1.msra.mxu0 %v1167
  %1209 = vmatprep.subr.mxu0 0.0
  %1210 = vmatpush1.msra.mxu0 %v1166
  %1211 = vmatprep.subr.mxu0 0.0
  %1212 = vmatpush1.msra.mxu0 %v1165
  %1213 = vmatprep.subr.mxu0 0.0
  %1214 = vmatpush2.msra.mxu0 0.0
  %1215 = vmatprep.subr.mxu0 0.0
  %1216 = vmatpush2.msra.mxu0 0.0
  %1217 = vmatprep.subr.mxu0 0.0
  %1218 = vmatpush2.msra.mxu0 0.0
  %1219 = vmatprep.subr.mxu0 0.0
  %1220 = vmatpush2.msra.mxu0 0.0
  %1221 = vmatprep.subr.mxu0 0.0
  %1222 = vmatpush2.msra.mxu0 0.0
  %1223 = vmatprep.subr.mxu0 0.0
  %1224 = vmatpush2.msra.mxu0 0.0
  %1225 = vmatprep.subr.mxu0 0.0
  %1226 = vmatpush2.msra.mxu0 0.0
  %1227 = vmatprep.subr.mxu0 0.0
  %1228 = vmatpush2.msra.mxu0 0.0
  %1229 = vmatprep.subr.mxu0 0.0
  %1230 = vmatpush2.msra.mxu0 0.0
  %1231 = vmatprep.subr.mxu0 0.0
  %1232 = vmatpush2.msra.mxu0 0.0
  %1233 = vmatprep.subr.mxu0 0.0
  %1234 = vmatpush2.msra.mxu0 0.0
  %1235 = vmatprep.subr.mxu0 0.0
  %1236 = vmatpush2.msra.mxu0 0.0
  %1237 = vmatprep.subr.mxu0 0.0
  %1238 = vmatpush2.msra.mxu0 0.0
  %1239 = vmatprep.subr.mxu0 0.0
  %1240 = vmatpush2.msra.mxu0 0.0
  %1241 = vmatprep.subr.mxu0 0.0
  %1242 = vmatpush2.msra.mxu0 0.0
  %1243 = vmatprep.subr.mxu0 0.0
  %1244 = vmatpush2.msra.mxu0 0.0
  %1245 = vmatprep.mubr.f32.mxu0 0.0
  %1246 = vmatmul.mubr.f32.gmra.mxu0 %v1163
  %v1247 = vpop.f32.mrf.mxu0
  %v1248 = vadd.f32 0.0, %v1247
  %v1249 = vpop.f32.mrf.mxu0
  %1250 = vmatprep.mubr.f32.mxu0 0.0
  %1251 = vmatmul.mubr.f32.gmra.mxu0 %v1164
  %v1252 = vpop.f32.mrf.mxu0
  %v1253 = vadd.f32 0.0, %v1252
  %v1254 = vpop.f32.mrf.mxu0
  %1255 = vdwg.mxu0
  %v1256 = vld [vmem:[%s15] sm:$0xff]
  %v1257 = vld [vmem:[%s15 + $0x8] sm:$0xff]
  %v1258 = vld [vmem:[%s15 + $0x10] sm:$0xff]
  %v1259 = vld [vmem:[%s15 + $0x18] sm:$0xff]
  %v1260 = vld [vmem:[%s15 + $0x20] sm:$0xff]
  %v1261 = vld [vmem:[%s15 + $0x28] sm:$0xff]
  %v1262 = vld [vmem:[%s15 + $0x30] sm:$0xff]
  %v1263 = vld [vmem:[%s15 + $0x38] sm:$0xff]
  %v1264 = vld [vmem:[%s15 + $0x40] sm:$0xff]
  %v1265 = vld [vmem:[%s15 + $0x48] sm:$0xff]
  %v1266 = vld [vmem:[%s15 + $0x50] sm:$0xff]
  %v1267 = vld [vmem:[%s15 + $0x58] sm:$0xff]
  %v1268 = vld [vmem:[%s15 + $0x60] sm:$0xff]
  %v1269 = vld [vmem:[%s15 + $0x68] sm:$0xff]
  %v1270 = vld [vmem:[%s15 + $0x70] sm:$0xff]
  %v1271 = vld [vmem:[%s15 + $0x78] sm:$0xff]
  %1272 = vmatprep.subr.mxu0 0.0
  %1273 = vmatpush1.msra.mxu0 %v1271
  %1274 = vmatprep.subr.mxu0 0.0
  %1275 = vmatpush1.msra.mxu0 %v1270
  %1276 = vmatprep.subr.mxu0 0.0
  %1277 = vmatpush1.msra.mxu0 %v1269
  %1278 = vmatprep.subr.mxu0 0.0
  %1279 = vmatpush1.msra.mxu0 %v1268
  %1280 = vmatprep.subr.mxu0 0.0
  %1281 = vmatpush1.msra.mxu0 %v1267
  %1282 = vmatprep.subr.mxu0 0.0
  %1283 = vmatpush1.msra.mxu0 %v1266
  %1284 = vmatprep.subr.mxu0 0.0
  %1285 = vmatpush1.msra.mxu0 %v1265
  %1286 = vmatprep.subr.mxu0 0.0
  %1287 = vmatpush1.msra.mxu0 %v1264
  %1288 = vmatprep.subr.mxu0 0.0
  %1289 = vmatpush1.msra.mxu0 %v1263
  %1290 = vmatprep.subr.mxu0 0.0
  %1291 = vmatpush1.msra.mxu0 %v1262
  %1292 = vmatprep.subr.mxu0 0.0
  %1293 = vmatpush1.msra.mxu0 %v1261
  %1294 = vmatprep.subr.mxu0 0.0
  %1295 = vmatpush1.msra.mxu0 %v1260
  %1296 = vmatprep.subr.mxu0 0.0
  %1297 = vmatpush1.msra.mxu0 %v1259
  %1298 = vmatprep.subr.mxu0 0.0
  %1299 = vmatpush1.msra.mxu0 %v1258
  %1300 = vmatprep.subr.mxu0 0.0
  %1301 = vmatpush1.msra.mxu0 %v1257
  %1302 = vmatprep.subr.mxu0 0.0
  %1303 = vmatpush1.msra.mxu0 %v1256
  %1304 = vmatprep.subr.mxu0 0.0
  %1305 = vmatpush2.msra.mxu0 0.0
  %1306 = vmatprep.subr.mxu0 0.0
  %1307 = vmatpush2.msra.mxu0 0.0
  %1308 = vmatprep.subr.mxu0 0.0
  %1309 = vmatpush2.msra.mxu0 0.0
  %1310 = vmatprep.subr.mxu0 0.0
  %1311 = vmatpush2.msra.mxu0 0.0
  %1312 = vmatprep.subr.mxu0 0.0
  %1313 = vmatpush2.msra.mxu0 0.0
  %1314 = vmatprep.subr.mxu0 0.0
  %1315 = vmatpush2.msra.mxu0 0.0
  %1316 = vmatprep.subr.mxu0 0.0
  %1317 = vmatpush2.msra.mxu0 0.0
  %1318 = vmatprep.subr.mxu0 0.0
  %1319 = vmatpush2.msra.mxu0 0.0
  %1320 = vmatprep.subr.mxu0 0.0
  %1321 = vmatpush2.msra.mxu0 0.0
  %1322 = vmatprep.subr.mxu0 0.0
  %1323 = vmatpush2.msra.mxu0 0.0
  %1324 = vmatprep.subr.mxu0 0.0
  %1325 = vmatpush2.msra.mxu0 0.0
  %1326 = vmatprep.subr.mxu0 0.0
  %1327 = vmatpush2.msra.mxu0 0.0
  %1328 = vmatprep.subr.mxu0 0.0
  %1329 = vmatpush2.msra.mxu0 0.0
  %1330 = vmatprep.subr.mxu0 0.0
  %1331 = vmatpush2.msra.mxu0 0.0
  %1332 = vmatprep.subr.mxu0 0.0
  %1333 = vmatpush2.msra.mxu0 0.0
  %1334 = vmatprep.subr.mxu0 0.0
  %1335 = vmatpush2.msra.mxu0 0.0
  %1336 = vmatprep.mubr.f32.mxu0 0.0
  %1337 = vmatmul.mubr.f32.gmra.mxu0 %v77
  %v1338 = vpop.f32.mrf.mxu0
  %v1339 = vadd.f32 0.0, %v1338
  %v1340 = vpop.f32.mrf.mxu0
  %1341 = vmatprep.mubr.f32.mxu0 0.0
  %1342 = vmatmul.mubr.f32.gmra.mxu0 %v78
  %v1343 = vpop.f32.mrf.mxu0
  %v1344 = vadd.f32 0.0, %v1343
  %v1345 = vpop.f32.mrf.mxu0
  %1346 = vmatprep.mubr.f32.mxu0 0.0
  %1347 = vmatmul.mubr.f32.gmra.mxu0 %v79
  %v1348 = vpop.f32.mrf.mxu0
  %v1349 = vadd.f32 0.0, %v1348
  %v1350 = vpop.f32.mrf.mxu0
  %1351 = vmatprep.mubr.f32.mxu0 0.0
  %1352 = vmatmul.mubr.f32.gmra.mxu0 %v80
  %v1353 = vpop.f32.mrf.mxu0
  %v1354 = vadd.f32 0.0, %v1353
  %v1355 = vpop.f32.mrf.mxu0
  %1356 = vdwg.mxu0
  %1357 = vmatprep.subr.mxu0 0.0
  %1358 = vmatpush1.msra.mxu0 0.0
  %1359 = vmatprep.subr.mxu0 0.0
  %1360 = vmatpush1.msra.mxu0 0.0
  %1361 = vmatprep.subr.mxu0 0.0
  %1362 = vmatpush1.msra.mxu0 0.0
  %1363 = vmatprep.subr.mxu0 0.0
  %1364 = vmatpush1.msra.mxu0 0.0
  %1365 = vmatprep.subr.mxu0 0.0
  %1366 = vmatpush1.msra.mxu0 0.0
  %1367 = vmatprep.subr.mxu0 0.0
  %1368 = vmatpush1.msra.mxu0 0.0
  %1369 = vmatprep.subr.mxu0 0.0
  %1370 = vmatpush1.msra.mxu0 0.0
  %1371 = vmatprep.subr.mxu0 0.0
  %1372 = vmatpush1.msra.mxu0 0.0
  %1373 = vmatprep.subr.mxu0 0.0
  %1374 = vmatpush1.msra.mxu0 0.0
  %1375 = vmatprep.subr.mxu0 0.0
  %1376 = vmatpush1.msra.mxu0 0.0
  %1377 = vmatprep.subr.mxu0 0.0
  %1378 = vmatpush1.msra.mxu0 0.0
  %1379 = vmatprep.subr.mxu0 0.0
  %1380 = vmatpush1.msra.mxu0 0.0
  %1381 = vmatprep.subr.mxu0 0.0
  %1382 = vmatpush1.msra.mxu0 0.0
  %1383 = vmatprep.subr.mxu0 0.0
  %1384 = vmatpush1.msra.mxu0 0.0
  %1385 = vmatprep.subr.mxu0 0.0
  %1386 = vmatpush1.msra.mxu0 %v1253
  %1387 = vmatprep.subr.mxu0 0.0
  %1388 = vmatpush1.msra.mxu0 %v1248
  %1389 = vmatprep.subr.mxu0 0.0
  %1390 = vmatpush2.msra.mxu0 0.0
  %1391 = vmatprep.subr.mxu0 0.0
  %1392 = vmatpush2.msra.mxu0 0.0
  %1393 = vmatprep.subr.mxu0 0.0
  %1394 = vmatpush2.msra.mxu0 0.0
  %1395 = vmatprep.subr.mxu0 0.0
  %1396 = vmatpush2.msra.mxu0 0.0
  %1397 = vmatprep.subr.mxu0 0.0
  %1398 = vmatpush2.msra.mxu0 0.0
  %1399 = vmatprep.subr.mxu0 0.0
  %1400 = vmatpush2.msra.mxu0 0.0
  %1401 = vmatprep.subr.mxu0 0.0
  %1402 = vmatpush2.msra.mxu0 0.0
  %1403 = vmatprep.subr.mxu0 0.0
  %1404 = vmatpush2.msra.mxu0 0.0
  %1405 = vmatprep.subr.mxu0 0.0
  %1406 = vmatpush2.msra.mxu0 0.0
  %1407 = vmatprep.subr.mxu0 0.0
  %1408 = vmatpush2.msra.mxu0 0.0
  %1409 = vmatprep.subr.mxu0 0.0
  %1410 = vmatpush2.msra.mxu0 0.0
  %1411 = vmatprep.subr.mxu0 0.0
  %1412 = vmatpush2.msra.mxu0 0.0
  %1413 = vmatprep.subr.mxu0 0.0
  %1414 = vmatpush2.msra.mxu0 0.0
  %1415 = vmatprep.subr.mxu0 0.0
  %1416 = vmatpush2.msra.mxu0 0.0
  %1417 = vmatprep.subr.mxu0 0.0
  %1418 = vmatpush2.msra.mxu0 0.0
  %1419 = vmatprep.subr.mxu0 0.0
  %1420 = vmatpush2.msra.mxu0 0.0
  %1421 = vmatprep.mubr.f32.mxu0 0.0
  %1422 = vmatmul.mubr.f32.gmra.mxu0 %v430
  %v1423 = vpop.f32.mrf.mxu0
  %v1424 = vadd.f32 0.0, %v1423
  %v1425 = vpop.f32.mrf.mxu0
  %1426 = vmatprep.mubr.f32.mxu0 0.0
  %1427 = vmatmul.mubr.f32.gmra.mxu0 %v433
  %v1428 = vpop.f32.mrf.mxu0
  %v1429 = vadd.f32 0.0, %v1428
  %v1430 = vpop.f32.mrf.mxu0
  %1431 = vmatprep.mubr.f32.mxu0 0.0
  %1432 = vmatmul.mubr.f32.gmra.mxu0 %v436
  %v1433 = vpop.f32.mrf.mxu0
  %v1434 = vadd.f32 0.0, %v1433
  %v1435 = vpop.f32.mrf.mxu0
  %1436 = vmatprep.mubr.f32.mxu0 0.0
  %1437 = vmatmul.mubr.f32.gmra.mxu0 %v439
  %v1438 = vpop.f32.mrf.mxu0
  %v1439 = vadd.f32 0.0, %v1438
  %v1440 = vpop.f32.mrf.mxu0
  %1441 = vdwg.mxu0
  %v1442 = vmul.f32 %v1424, %v1339
  %v1443 = vmul.f32 %v1429, %v1344
  %v1444 = vmul.f32 %v1434, %v1349
  %v1445 = vmul.f32 %v1439, %v1354
  %1446 = vmatprep.subr.mxu0 0.0
  %1447 = vmatpush1.msra.mxu0 0.0
  %1448 = vmatprep.subr.mxu0 0.0
  %1449 = vmatpush1.msra.mxu0 0.0
  %1450 = vmatprep.subr.mxu0 0.0
  %1451 = vmatpush1.msra.mxu0 0.0
  %1452 = vmatprep.subr.mxu0 0.0
  %1453 = vmatpush1.msra.mxu0 0.0
  %1454 = vmatprep.subr.mxu0 0.0
  %1455 = vmatpush1.msra.mxu0 0.0
  %1456 = vmatprep.subr.mxu0 0.0
  %1457 = vmatpush1.msra.mxu0 0.0
  %1458 = vmatprep.subr.mxu0 0.0
  %1459 = vmatpush1.msra.mxu0 0.0
  %1460 = vmatprep.subr.mxu0 0.0
  %1461 = vmatpush1.msra.mxu0 0.0
  %1462 = vmatprep.subr.mxu0 0.0
  %1463 = vmatpush1.msra.mxu0 0.0
  %1464 = vmatprep.subr.mxu0 0.0
  %1465 = vmatpush1.msra.mxu0 0.0
  %1466 = vmatprep.subr.mxu0 0.0
  %1467 = vmatpush1.msra.mxu0 0.0
  %1468 = vmatprep.subr.mxu0 0.0
  %1469 = vmatpush1.msra.mxu0 0.0
  %1470 = vmatprep.subr.mxu0 0.0
  %1471 = vmatpush1.msra.mxu0 %v1445
  %1472 = vmatprep.subr.mxu0 0.0
  %1473 = vmatpush1.msra.mxu0 %v1444
  %1474 = vmatprep.subr.mxu0 0.0
  %1475 = vmatpush1.msra.mxu0 %v1443
  %1476 = vmatprep.subr.mxu0 0.0
  %1477 = vmatpush1.msra.mxu0 %v1442
  %1478 = vmatprep.subr.mxu0 0.0
  %1479 = vmatpush2.msra.mxu0 0.0
  %1480 = vmatprep.subr.mxu0 0.0
  %1481 = vmatpush2.msra.mxu0 0.0
  %1482 = vmatprep.subr.mxu0 0.0
  %1483 = vmatpush2.msra.mxu0 0.0
  %1484 = vmatprep.subr.mxu0 0.0
  %1485 = vmatpush2.msra.mxu0 0.0
  %1486 = vmatprep.subr.mxu0 0.0
  %1487 = vmatpush2.msra.mxu0 0.0
  %1488 = vmatprep.subr.mxu0 0.0
  %1489 = vmatpush2.msra.mxu0 0.0
  %1490 = vmatprep.subr.mxu0 0.0
  %1491 = vmatpush2.msra.mxu0 0.0
  %1492 = vmatprep.subr.mxu0 0.0
  %1493 = vmatpush2.msra.mxu0 0.0
  %1494 = vmatprep.subr.mxu0 0.0
  %1495 = vmatpush2.msra.mxu0 0.0
  %1496 = vmatprep.subr.mxu0 0.0
  %1497 = vmatpush2.msra.mxu0 0.0
  %1498 = vmatprep.subr.mxu0 0.0
  %1499 = vmatpush2.msra.mxu0 0.0
  %1500 = vmatprep.subr.mxu0 0.0
  %1501 = vmatpush2.msra.mxu0 0.0
  %1502 = vmatprep.subr.mxu0 0.0
  %1503 = vmatpush2.msra.mxu0 0.0
  %1504 = vmatprep.subr.mxu0 0.0
  %1505 = vmatpush2.msra.mxu0 0.0
  %1506 = vmatprep.subr.mxu0 0.0
  %1507 = vmatpush2.msra.mxu0 0.0
  %1508 = vmatprep.subr.mxu0 0.0
  %1509 = vmatpush2.msra.mxu0 0.0
  %1510 = vmatprep.mubr.f32.mxu0 0.0
  %1511 = vmatmul.mubr.f32.gmra.mxu0 %v532
  %v1512 = vpop.f32.mrf.mxu0
  %v1513 = vadd.f32 0.0, %v1512
  %v1514 = vpop.f32.mrf.mxu0
  %1515 = vmatprep.mubr.f32.mxu0 0.0
  %1516 = vmatmul.mubr.f32.gmra.mxu0 %v535
  %v1517 = vpop.f32.mrf.mxu0
  %v1518 = vadd.f32 0.0, %v1517
  %v1519 = vpop.f32.mrf.mxu0
  %1520 = vdwg.mxu0
  %v1521 = vld [vmem:[%s16] sm:$0xff]
  %v1522 = vld [vmem:[%s16 + $0x8] sm:$0xff]
  %v1523 = vld [vmem:[%s16 + $0x10] sm:$0xff]
  %v1524 = vld [vmem:[%s16 + $0x18] sm:$0xff]
  %v1525 = vld [vmem:[%s16 + $0x20] sm:$0xff]
  %v1526 = vld [vmem:[%s16 + $0x28] sm:$0xff]
  %v1527 = vld [vmem:[%s16 + $0x30] sm:$0xff]
  %v1528 = vld [vmem:[%s16 + $0x38] sm:$0xff]
  %v1529 = vld [vmem:[%s16 + $0x40] sm:$0xff]
  %v1530 = vld [vmem:[%s16 + $0x48] sm:$0xff]
  %v1531 = vld [vmem:[%s16 + $0x50] sm:$0xff]
  %v1532 = vld [vmem:[%s16 + $0x58] sm:$0xff]
  %v1533 = vld [vmem:[%s16 + $0x60] sm:$0xff]
  %v1534 = vld [vmem:[%s16 + $0x68] sm:$0xff]
  %v1535 = vld [vmem:[%s16 + $0x70] sm:$0xff]
  %v1536 = vld [vmem:[%s16 + $0x78] sm:$0xff]
  %1537 = vmatprep.subr.mxu0 0.0
  %1538 = vmatpush1.msra.mxu0 %v1536
  %1539 = vmatprep.subr.mxu0 0.0
  %1540 = vmatpush1.msra.mxu0 %v1535
  %1541 = vmatprep.subr.mxu0 0.0
  %1542 = vmatpush1.msra.mxu0 %v1534
  %1543 = vmatprep.subr.mxu0 0.0
  %1544 = vmatpush1.msra.mxu0 %v1533
  %1545 = vmatprep.subr.mxu0 0.0
  %1546 = vmatpush1.msra.mxu0 %v1532
  %1547 = vmatprep.subr.mxu0 0.0
  %1548 = vmatpush1.msra.mxu0 %v1531
  %1549 = vmatprep.subr.mxu0 0.0
  %1550 = vmatpush1.msra.mxu0 %v1530
  %1551 = vmatprep.subr.mxu0 0.0
  %1552 = vmatpush1.msra.mxu0 %v1529
  %1553 = vmatprep.subr.mxu0 0.0
  %1554 = vmatpush1.msra.mxu0 %v1528
  %1555 = vmatprep.subr.mxu0 0.0
  %1556 = vmatpush1.msra.mxu0 %v1527
  %1557 = vmatprep.subr.mxu0 0.0
  %1558 = vmatpush1.msra.mxu0 %v1526
  %1559 = vmatprep.subr.mxu0 0.0
  %1560 = vmatpush1.msra.mxu0 %v1525
  %1561 = vmatprep.subr.mxu0 0.0
  %1562 = vmatpush1.msra.mxu0 %v1524
  %1563 = vmatprep.subr.mxu0 0.0
  %1564 = vmatpush1.msra.mxu0 %v1523
  %1565 = vmatprep.subr.mxu0 0.0
  %1566 = vmatpush1.msra.mxu0 %v1522
  %1567 = vmatprep.subr.mxu0 0.0
  %1568 = vmatpush1.msra.mxu0 %v1521
  %1569 = vmatprep.subr.mxu0 0.0
  %1570 = vmatpush2.msra.mxu0 0.0
  %1571 = vmatprep.subr.mxu0 0.0
  %1572 = vmatpush2.msra.mxu0 0.0
  %1573 = vmatprep.subr.mxu0 0.0
  %1574 = vmatpush2.msra.mxu0 0.0
  %1575 = vmatprep.subr.mxu0 0.0
  %1576 = vmatpush2.msra.mxu0 0.0
  %1577 = vmatprep.subr.mxu0 0.0
  %1578 = vmatpush2.msra.mxu0 0.0
  %1579 = vmatprep.subr.mxu0 0.0
  %1580 = vmatpush2.msra.mxu0 0.0
  %1581 = vmatprep.subr.mxu0 0.0
  %1582 = vmatpush2.msra.mxu0 0.0
  %1583 = vmatprep.subr.mxu0 0.0
  %1584 = vmatpush2.msra.mxu0 0.0
  %1585 = vmatprep.subr.mxu0 0.0
  %1586 = vmatpush2.msra.mxu0 0.0
  %1587 = vmatprep.subr.mxu0 0.0
  %1588 = vmatpush2.msra.mxu0 0.0
  %1589 = vmatprep.subr.mxu0 0.0
  %1590 = vmatpush2.msra.mxu0 0.0
  %1591 = vmatprep.subr.mxu0 0.0
  %1592 = vmatpush2.msra.mxu0 0.0
  %1593 = vmatprep.subr.mxu0 0.0
  %1594 = vmatpush2.msra.mxu0 0.0
  %1595 = vmatprep.subr.mxu0 0.0
  %1596 = vmatpush2.msra.mxu0 0.0
  %1597 = vmatprep.subr.mxu0 0.0
  %1598 = vmatpush2.msra.mxu0 0.0
  %1599 = vmatprep.subr.mxu0 0.0
  %1600 = vmatpush2.msra.mxu0 0.0
  %1601 = vmatprep.mubr.f32.mxu0 0.0
  %1602 = vmatmul.mubr.f32.gmra.mxu0 %v1163
  %v1603 = vpop.f32.mrf.mxu0
  %v1604 = vadd.f32 0.0, %v1603
  %v1605 = vpop.f32.mrf.mxu0
  %1606 = vmatprep.mubr.f32.mxu0 0.0
  %1607 = vmatmul.mubr.f32.gmra.mxu0 %v1164
  %v1608 = vpop.f32.mrf.mxu0
  %v1609 = vadd.f32 0.0, %v1608
  %v1610 = vpop.f32.mrf.mxu0
  %1611 = vdwg.mxu0
  %v1612 = vmul.f32 %v1513, %v1604
  %v1613 = vmul.f32 %v1518, %v1609
  %v1614 = vld [vmem:[%s17] sm:$0xff]
  %v1615 = vld [vmem:[%s17 + $0x8] sm:$0xff]
  %v1616 = vld [vmem:[%s17 + $0x10] sm:$0xff]
  %v1617 = vld [vmem:[%s17 + $0x18] sm:$0xff]
  %v1618 = vld [vmem:[%s17 + $0x20] sm:$0xff]
  %v1619 = vld [vmem:[%s17 + $0x28] sm:$0xff]
  %v1620 = vld [vmem:[%s17 + $0x30] sm:$0xff]
  %v1621 = vld [vmem:[%s17 + $0x38] sm:$0xff]
  %v1622 = vld [vmem:[%s17 + $0x40] sm:$0xff]
  %v1623 = vld [vmem:[%s17 + $0x48] sm:$0xff]
  %v1624 = vld [vmem:[%s17 + $0x50] sm:$0xff]
  %v1625 = vld [vmem:[%s17 + $0x58] sm:$0xff]
  %v1626 = vld [vmem:[%s17 + $0x60] sm:$0xff]
  %v1627 = vld [vmem:[%s17 + $0x68] sm:$0xff]
  %v1628 = vld [vmem:[%s17 + $0x70] sm:$0xff]
  %v1629 = vld [vmem:[%s17 + $0x78] sm:$0xff]
  %v1630 = vld [vmem:[#allocation2] sm:$0x1]
  %v1632 = vlaneseq
  %v1633 = vshrl.u32 %v1632, 7
  %v1634 = vsub.s32 0, %v1633
  %v1635 = vrot.slane %v1630, %v1634
  %1637 = vmatprep.subr.mxu0 0.0
  %1638 = vmatpush1.msra.mxu0 %v1629
  %1639 = vmatprep.subr.mxu0 0.0
  %1640 = vmatpush1.msra.mxu0 %v1628
  %1641 = vmatprep.subr.mxu0 0.0
  %1642 = vmatpush1.msra.mxu0 %v1627
  %1643 = vmatprep.subr.mxu0 0.0
  %1644 = vmatpush1.msra.mxu0 %v1626
  %1645 = vmatprep.subr.mxu0 0.0
  %1646 = vmatpush1.msra.mxu0 %v1625
  %1647 = vmatprep.subr.mxu0 0.0
  %1648 = vmatpush1.msra.mxu0 %v1624
  %1649 = vmatprep.subr.mxu0 0.0
  %1650 = vmatpush1.msra.mxu0 %v1623
  %1651 = vmatprep.subr.mxu0 0.0
  %1652 = vmatpush1.msra.mxu0 %v1622
  %1653 = vmatprep.subr.mxu0 0.0
  %1654 = vmatpush1.msra.mxu0 %v1621
  %1655 = vmatprep.subr.mxu0 0.0
  %1656 = vmatpush1.msra.mxu0 %v1620
  %1657 = vmatprep.subr.mxu0 0.0
  %1658 = vmatpush1.msra.mxu0 %v1619
  %1659 = vmatprep.subr.mxu0 0.0
  %1660 = vmatpush1.msra.mxu0 %v1618
  %1661 = vmatprep.subr.mxu0 0.0
  %1662 = vmatpush1.msra.mxu0 %v1617
  %1663 = vmatprep.subr.mxu0 0.0
  %1664 = vmatpush1.msra.mxu0 %v1616
  %1665 = vmatprep.subr.mxu0 0.0
  %1666 = vmatpush1.msra.mxu0 %v1615
  %1667 = vmatprep.subr.mxu0 0.0
  %1668 = vmatpush1.msra.mxu0 %v1614
  %1669 = vmatprep.subr.mxu0 0.0
  %1670 = vmatpush2.msra.mxu0 0.0
  %1671 = vmatprep.subr.mxu0 0.0
  %1672 = vmatpush2.msra.mxu0 0.0
  %1673 = vmatprep.subr.mxu0 0.0
  %1674 = vmatpush2.msra.mxu0 0.0
  %1675 = vmatprep.subr.mxu0 0.0
  %1676 = vmatpush2.msra.mxu0 0.0
  %1677 = vmatprep.subr.mxu0 0.0
  %1678 = vmatpush2.msra.mxu0 0.0
  %1679 = vmatprep.subr.mxu0 0.0
  %1680 = vmatpush2.msra.mxu0 0.0
  %1681 = vmatprep.subr.mxu0 0.0
  %1682 = vmatpush2.msra.mxu0 0.0
  %1683 = vmatprep.subr.mxu0 0.0
  %1684 = vmatpush2.msra.mxu0 0.0
  %1685 = vmatprep.subr.mxu0 0.0
  %1686 = vmatpush2.msra.mxu0 0.0
  %1687 = vmatprep.subr.mxu0 0.0
  %1688 = vmatpush2.msra.mxu0 0.0
  %1689 = vmatprep.subr.mxu0 0.0
  %1690 = vmatpush2.msra.mxu0 0.0
  %1691 = vmatprep.subr.mxu0 0.0
  %1692 = vmatpush2.msra.mxu0 0.0
  %1693 = vmatprep.subr.mxu0 0.0
  %1694 = vmatpush2.msra.mxu0 0.0
  %1695 = vmatprep.subr.mxu0 0.0
  %1696 = vmatpush2.msra.mxu0 0.0
  %1697 = vmatprep.subr.mxu0 0.0
  %1698 = vmatpush2.msra.mxu0 0.0
  %1699 = vmatprep.subr.mxu0 0.0
  %1700 = vmatpush2.msra.mxu0 0.0
  %1701 = vmatprep.mubr.f32.mxu0 0.0
  %1702 = vmatmul.mubr.f32.gmra.mxu0 %v1612
  %v1703 = vpop.f32.mrf.mxu0
  %v1704 = vadd.f32 %v1635, %v1703
  %v1705 = vpop.f32.mrf.mxu0
  %1706 = vmatprep.mubr.f32.mxu0 0.0
  %1707 = vmatmul.mubr.f32.gmra.mxu0 %v1613
  %v1708 = vpop.f32.mrf.mxu0
  %v1709 = vadd.f32 %v1635, %v1708
  %v1710 = vpop.f32.mrf.mxu0
  %1711 = vdwg.mxu0
  %v1712 = vxor.u32 %v1704, 2147483648
  %v1713 = vxor.u32 %v1709, 2147483648
  %v1714 = vmul.f32 %v1712, 1.442695
  %v1715 = vpow.pop %v1714
  %v1716 = vmul.f32 %v1713, 1.442695
  %v1717 = vpow.pop %v1716
  %v1718 = vadd.f32 %v1715, 1.0
  %v1719 = vadd.f32 %v1717, 1.0
  %v1720 = vrcp.pop %v1718
  %v1721 = vmul.f32 1.0, %v1720
  %v1722 = vrcp.pop %v1719
  %v1723 = vmul.f32 1.0, %v1722
  %1725 = vset.pattern.permute.xlu0 0
  %1726 = vperm.xlu0 %1725, %v1721
  %v1727 = vpop.permute.xlu0 %1726
  %1730 = vset.pattern.permute.xlu0 0
  %1731 = vperm.xlu0 %1730, %v1723
  %v1732 = vpop.permute.xlu0 %1731
  %v1734 = vmul.f32 %v1727, %v1612
  %v1735 = vmul.f32 %v1732, %v1613
  %v1737 = vsel %vm428, %v93, 0
  %1739 = vmatprep.subr.mxu0 0.0
  %1740 = vmatpush1.msra.mxu0 0.0
  %1741 = vmatprep.subr.mxu0 0.0
  %1742 = vmatpush1.msra.mxu0 0.0
  %1743 = vmatprep.subr.mxu0 0.0
  %1744 = vmatpush1.msra.mxu0 0.0
  %1745 = vmatprep.subr.mxu0 0.0
  %1746 = vmatpush1.msra.mxu0 0.0
  %1747 = vmatprep.subr.mxu0 0.0
  %1748 = vmatpush1.msra.mxu0 0.0
  %1749 = vmatprep.subr.mxu0 0.0
  %1750 = vmatpush1.msra.mxu0 0.0
  %1751 = vmatprep.subr.mxu0 0.0
  %1752 = vmatpush1.msra.mxu0 0.0
  %1753 = vmatprep.subr.mxu0 0.0
  %1754 = vmatpush1.msra.mxu0 0.0
  %1755 = vmatprep.subr.mxu0 0.0
  %1756 = vmatpush1.msra.mxu0 0.0
  %1757 = vmatprep.subr.mxu0 0.0
  %1758 = vmatpush1.msra.mxu0 0.0
  %1759 = vmatprep.subr.mxu0 0.0
  %1760 = vmatpush1.msra.mxu0 0.0
  %1761 = vmatprep.subr.mxu0 0.0
  %1762 = vmatpush1.msra.mxu0 0.0
  %1763 = vmatprep.subr.mxu0 0.0
  %1764 = vmatpush1.msra.mxu0 0.0
  %1765 = vmatprep.subr.mxu0 0.0
  %1766 = vmatpush1.msra.mxu0 0.0
  %1767 = vmatprep.subr.mxu0 0.0
  %1768 = vmatpush1.msra.mxu0 %v1735
  %1769 = vmatprep.subr.mxu0 0.0
  %1770 = vmatpush1.msra.mxu0 %v1734
  %1771 = vmatprep.subr.mxu0 0.0
  %1772 = vmatpush2.msra.mxu0 0.0
  %1773 = vmatprep.subr.mxu0 0.0
  %1774 = vmatpush2.msra.mxu0 0.0
  %1775 = vmatprep.subr.mxu0 0.0
  %1776 = vmatpush2.msra.mxu0 0.0
  %1777 = vmatprep.subr.mxu0 0.0
  %1778 = vmatpush2.msra.mxu0 0.0
  %1779 = vmatprep.subr.mxu0 0.0
  %1780 = vmatpush2.msra.mxu0 0.0
  %1781 = vmatprep.subr.mxu0 0.0
  %1782 = vmatpush2.msra.mxu0 0.0
  %1783 = vmatprep.subr.mxu0 0.0
  %1784 = vmatpush2.msra.mxu0 0.0
  %1785 = vmatprep.subr.mxu0 0.0
  %1786 = vmatpush2.msra.mxu0 0.0
  %1787 = vmatprep.subr.mxu0 0.0
  %1788 = vmatpush2.msra.mxu0 0.0
  %1789 = vmatprep.subr.mxu0 0.0
  %1790 = vmatpush2.msra.mxu0 0.0
  %1791 = vmatprep.subr.mxu0 0.0
  %1792 = vmatpush2.msra.mxu0 0.0
  %1793 = vmatprep.subr.mxu0 0.0
  %1794 = vmatpush2.msra.mxu0 0.0
  %1795 = vmatprep.subr.mxu0 0.0
  %1796 = vmatpush2.msra.mxu0 0.0
  %1797 = vmatprep.subr.mxu0 0.0
  %1798 = vmatpush2.msra.mxu0 0.0
  %1799 = vmatprep.subr.mxu0 0.0
  %1800 = vmatpush2.msra.mxu0 0.0
  %1801 = vmatprep.subr.mxu0 0.0
  %1802 = vmatpush2.msra.mxu0 0.0
  %1803 = vmatprep.mubr.f32.mxu0 0.0
  %1804 = vmatmul.mubr.f32.gmra.mxu0 %v1737
  %v1805 = vpop.f32.mrf.mxu0
  %v1806 = vadd.f32 0.0, %v1805
  %v1807 = vpop.f32.mrf.mxu0
  %1808 = vdwg.mxu0
  %vm1809 = vcmp.gt.f32.partialorder %v94, 0.5
  %vm1810 = vcmp.gt.f32.partialorder %v95, 0.5
  %v1811 = vsel %vm1809, 1, 0
  %v1812 = vsel %vm1810, 1, 0
  %1813 = vset.pattern.permute.xlu0 0
  %1814 = vperm.xlu0 %1813, %v1811
  %v1815 = vpop.permute.xlu0 %1814
  %1816 = vset.pattern.permute.xlu0 0
  %1817 = vperm.xlu0 %1816, %v1812
  %v1818 = vpop.permute.xlu0 %1817
  %vm1819 = vcmp.eq.s32.totalorder %v1815, 1
  %vm1820 = vcmp.eq.s32.totalorder %v1818, 1
  %v1821 = vsel %vm1819, %v1612, -3.4028235e+38
  %v1822 = vsel %vm1820, %v1613, -3.4028235e+38
  %v1823 = vmax.f32 %v1821, %v1822
  %v1824 = vrot.slane %v1823, 4
  %v1825 = vmax.f32 %v1823, %v1824
  %v1826 = vrot.slane %v1825, 2
  %v1827 = vmax.f32 %v1825, %v1826
  %v1828 = vrot.slane %v1827, 1
  %v1829 = vmax.f32 %v1827, %v1828
  %1830 = vset.pattern.permute.xlu0 1
  %1831 = vperm.xlu0 %1830, %v1811
  %v1832 = vpop.permute.xlu0 %1831
  %1833 = vset.pattern.permute.xlu0 1
  %1834 = vperm.xlu0 %1833, %v1812
  %v1835 = vpop.permute.xlu0 %1834
  %vm1836 = vcmp.eq.s32.totalorder %v1832, 1
  %vm1837 = vcmp.eq.s32.totalorder %v1835, 1
  %v1838 = vsel %vm1836, %v1612, -3.4028235e+38
  %v1839 = vsel %vm1837, %v1613, -3.4028235e+38
  %v1840 = vmax.f32 %v1838, %v1839
  %v1841 = vrot.slane %v1840, 4
  %v1842 = vmax.f32 %v1840, %v1841
  %v1843 = vrot.slane %v1842, 2
  %v1844 = vmax.f32 %v1842, %v1843
  %v1845 = vrot.slane %v1844, 1
  %v1846 = vmax.f32 %v1844, %v1845
  %vm1847 = vcmask 1040384
  %v1848 = vsel %vm1847, %v1829, %v1846
  %v1849 = vld [vmem:[%s19] sm:$0xff]
  %v1850 = vld [vmem:[%s19 + $0x8] sm:$0xff]
  %v1851 = vld [vmem:[%s19 + $0x10] sm:$0xff]
  %v1852 = vld [vmem:[%s19 + $0x18] sm:$0xff]
  %v1853 = vld [vmem:[%s19 + $0x20] sm:$0xff]
  %v1854 = vld [vmem:[%s19 + $0x28] sm:$0xff]
  %v1855 = vld [vmem:[%s19 + $0x30] sm:$0xff]
  %v1856 = vld [vmem:[%s19 + $0x38] sm:$0xff]
  %v1857 = vld [vmem:[%s19 + $0x40] sm:$0xff]
  %v1858 = vld [vmem:[%s19 + $0x48] sm:$0xff]
  %v1859 = vld [vmem:[%s19 + $0x50] sm:$0xff]
  %v1860 = vld [vmem:[%s19 + $0x58] sm:$0xff]
  %v1861 = vld [vmem:[%s19 + $0x60] sm:$0xff]
  %v1862 = vld [vmem:[%s19 + $0x68] sm:$0xff]
  %v1863 = vld [vmem:[%s19 + $0x70] sm:$0xff]
  %v1864 = vld [vmem:[%s19 + $0x78] sm:$0xff]
  %v1865 = vld [vmem:[%s20] sm:$0xff]
  %v1866 = vld [vmem:[%s20 + $0x8] sm:$0xff]
  %v1867 = vld [vmem:[%s20 + $0x10] sm:$0xff]
  %v1868 = vld [vmem:[%s20 + $0x18] sm:$0xff]
  %v1869 = vld [vmem:[%s20 + $0x20] sm:$0xff]
  %v1870 = vld [vmem:[%s20 + $0x28] sm:$0xff]
  %v1871 = vld [vmem:[%s20 + $0x30] sm:$0xff]
  %v1872 = vld [vmem:[%s20 + $0x38] sm:$0xff]
  %v1873 = vld [vmem:[%s20 + $0x40] sm:$0xff]
  %v1874 = vld [vmem:[%s20 + $0x48] sm:$0xff]
  %v1875 = vld [vmem:[%s20 + $0x50] sm:$0xff]
  %v1876 = vld [vmem:[%s20 + $0x58] sm:$0xff]
  %v1877 = vld [vmem:[%s20 + $0x60] sm:$0xff]
  %v1878 = vld [vmem:[%s20 + $0x68] sm:$0xff]
  %v1879 = vld [vmem:[%s20 + $0x70] sm:$0xff]
  %v1880 = vld [vmem:[%s20 + $0x78] sm:$0xff]
  %1881 = vmatprep.subr.mxu0 0.0
  %1882 = vmatpush1.msra.mxu0 %v1880
  %1883 = vmatprep.subr.mxu0 0.0
  %1884 = vmatpush1.msra.mxu0 %v1879
  %1885 = vmatprep.subr.mxu0 0.0
  %1886 = vmatpush1.msra.mxu0 %v1878
  %1887 = vmatprep.subr.mxu0 0.0
  %1888 = vmatpush1.msra.mxu0 %v1877
  %1889 = vmatprep.subr.mxu0 0.0
  %1890 = vmatpush1.msra.mxu0 %v1876
  %1891 = vmatprep.subr.mxu0 0.0
  %1892 = vmatpush1.msra.mxu0 %v1875
  %1893 = vmatprep.subr.mxu0 0.0
  %1894 = vmatpush1.msra.mxu0 %v1874
  %1895 = vmatprep.subr.mxu0 0.0
  %1896 = vmatpush1.msra.mxu0 %v1873
  %1897 = vmatprep.subr.mxu0 0.0
  %1898 = vmatpush1.msra.mxu0 %v1872
  %1899 = vmatprep.subr.mxu0 0.0
  %1900 = vmatpush1.msra.mxu0 %v1871
  %1901 = vmatprep.subr.mxu0 0.0
  %1902 = vmatpush1.msra.mxu0 %v1870
  %1903 = vmatprep.subr.mxu0 0.0
  %1904 = vmatpush1.msra.mxu0 %v1869
  %1905 = vmatprep.subr.mxu0 0.0
  %1906 = vmatpush1.msra.mxu0 %v1868
  %1907 = vmatprep.subr.mxu0 0.0
  %1908 = vmatpush1.msra.mxu0 %v1867
  %1909 = vmatprep.subr.mxu0 0.0
  %1910 = vmatpush1.msra.mxu0 %v1866
  %1911 = vmatprep.subr.mxu0 0.0
  %1912 = vmatpush1.msra.mxu0 %v1865
  %1913 = vmatprep.subr.mxu0 0.0
  %1914 = vmatpush2.msra.mxu0 0.0
  %1915 = vmatprep.subr.mxu0 0.0
  %1916 = vmatpush2.msra.mxu0 0.0
  %1917 = vmatprep.subr.mxu0 0.0
  %1918 = vmatpush2.msra.mxu0 0.0
  %1919 = vmatprep.subr.mxu0 0.0
  %1920 = vmatpush2.msra.mxu0 0.0
  %1921 = vmatprep.subr.mxu0 0.0
  %1922 = vmatpush2.msra.mxu0 0.0
  %1923 = vmatprep.subr.mxu0 0.0
  %1924 = vmatpush2.msra.mxu0 0.0
  %1925 = vmatprep.subr.mxu0 0.0
  %1926 = vmatpush2.msra.mxu0 0.0
  %1927 = vmatprep.subr.mxu0 0.0
  %1928 = vmatpush2.msra.mxu0 0.0
  %1929 = vmatprep.subr.mxu0 0.0
  %1930 = vmatpush2.msra.mxu0 0.0
  %1931 = vmatprep.subr.mxu0 0.0
  %1932 = vmatpush2.msra.mxu0 0.0
  %1933 = vmatprep.subr.mxu0 0.0
  %1934 = vmatpush2.msra.mxu0 0.0
  %1935 = vmatprep.subr.mxu0 0.0
  %1936 = vmatpush2.msra.mxu0 0.0
  %1937 = vmatprep.subr.mxu0 0.0
  %1938 = vmatpush2.msra.mxu0 0.0
  %1939 = vmatprep.subr.mxu0 0.0
  %1940 = vmatpush2.msra.mxu0 0.0
  %1941 = vmatprep.subr.mxu0 0.0
  %1942 = vmatpush2.msra.mxu0 0.0
  %1943 = vmatprep.subr.mxu0 0.0
  %1944 = vmatpush2.msra.mxu0 0.0
  %1945 = vmatprep.mubr.f32.mxu0 0.0
  %1946 = vmatmul.mubr.f32.gmra.mxu0 %v1848
  %v1947 = vpop.f32.mrf.mxu0
  %v1948 = vadd.f32 0.0, %v1947
  %v1949 = vpop.f32.mrf.mxu0
  %1950 = vdwg.mxu0
  %1951 = vmatprep.subr.mxu0 0.0
  %1952 = vmatpush1.msra.mxu0 %v1864
  %1953 = vmatprep.subr.mxu0 0.0
  %1954 = vmatpush1.msra.mxu0 %v1863
  %1955 = vmatprep.subr.mxu0 0.0
  %1956 = vmatpush1.msra.mxu0 %v1862
  %1957 = vmatprep.subr.mxu0 0.0
  %1958 = vmatpush1.msra.mxu0 %v1861
  %1959 = vmatprep.subr.mxu0 0.0
  %1960 = vmatpush1.msra.mxu0 %v1860
  %1961 = vmatprep.subr.mxu0 0.0
  %1962 = vmatpush1.msra.mxu0 %v1859
  %1963 = vmatprep.subr.mxu0 0.0
  %1964 = vmatpush1.msra.mxu0 %v1858
  %1965 = vmatprep.subr.mxu0 0.0
  %1966 = vmatpush1.msra.mxu0 %v1857
  %1967 = vmatprep.subr.mxu0 0.0
  %1968 = vmatpush1.msra.mxu0 %v1856
  %1969 = vmatprep.subr.mxu0 0.0
  %1970 = vmatpush1.msra.mxu0 %v1855
  %1971 = vmatprep.subr.mxu0 0.0
  %1972 = vmatpush1.msra.mxu0 %v1854
  %1973 = vmatprep.subr.mxu0 0.0
  %1974 = vmatpush1.msra.mxu0 %v1853
  %1975 = vmatprep.subr.mxu0 0.0
  %1976 = vmatpush1.msra.mxu0 %v1852
  %1977 = vmatprep.subr.mxu0 0.0
  %1978 = vmatpush1.msra.mxu0 %v1851
  %1979 = vmatprep.subr.mxu0 0.0
  %1980 = vmatpush1.msra.mxu0 %v1850
  %1981 = vmatprep.subr.mxu0 0.0
  %1982 = vmatpush1.msra.mxu0 %v1849
  %1983 = vmatprep.subr.mxu0 0.0
  %1984 = vmatpush2.msra.mxu0 0.0
  %1985 = vmatprep.subr.mxu0 0.0
  %1986 = vmatpush2.msra.mxu0 0.0
  %1987 = vmatprep.subr.mxu0 0.0
  %1988 = vmatpush2.msra.mxu0 0.0
  %1989 = vmatprep.subr.mxu0 0.0
  %1990 = vmatpush2.msra.mxu0 0.0
  %1991 = vmatprep.subr.mxu0 0.0
  %1992 = vmatpush2.msra.mxu0 0.0
  %1993 = vmatprep.subr.mxu0 0.0
  %1994 = vmatpush2.msra.mxu0 0.0
  %1995 = vmatprep.subr.mxu0 0.0
  %1996 = vmatpush2.msra.mxu0 0.0
  %1997 = vmatprep.subr.mxu0 0.0
  %1998 = vmatpush2.msra.mxu0 0.0
  %1999 = vmatprep.subr.mxu0 0.0
  %2000 = vmatpush2.msra.mxu0 0.0
  %2001 = vmatprep.subr.mxu0 0.0
  %2002 = vmatpush2.msra.mxu0 0.0
  %2003 = vmatprep.subr.mxu0 0.0
  %2004 = vmatpush2.msra.mxu0 0.0
  %2005 = vmatprep.subr.mxu0 0.0
  %2006 = vmatpush2.msra.mxu0 0.0
  %2007 = vmatprep.subr.mxu0 0.0
  %2008 = vmatpush2.msra.mxu0 0.0
  %2009 = vmatprep.subr.mxu0 0.0
  %2010 = vmatpush2.msra.mxu0 0.0
  %2011 = vmatprep.subr.mxu0 0.0
  %2012 = vmatpush2.msra.mxu0 0.0
  %2013 = vmatprep.subr.mxu0 0.0
  %2014 = vmatpush2.msra.mxu0 0.0
  %2015 = vmatprep.mubr.f32.mxu0 0.0
  %2016 = vmatmul.mubr.f32.gmra.mxu0 %v1806
  %v2017 = vpop.f32.mrf.mxu0
  %v2018 = vadd.f32 %v1948, %v2017
  %v2019 = vpop.f32.mrf.mxu0
  %2020 = vdwg.mxu0
  %v2021 = vld [vmem:[#allocation3] sm:$0x1]
  %v2023 = vlaneseq
  %v2024 = vshrl.u32 %v2023, 7
  %v2025 = vsub.s32 0, %v2024
  %v2026 = vrot.slane %v2021, %v2025
  %v2028 = vadd.f32 %v2018, %v2026
  %vm2029 = vcmask 1024
  %2030 = vst.msk [vmem:[%s22] sm:$0x3] %vm2029, %v2028
  // Predicated region
  $region90: #{wln_predictor_forward.1} parent=0 // pred_check
    _
  $region91: #{wln_predictor_forward.1} parent=0 // pred_check_branch
    %2032 = sbr.rel (0) target = $region93
  $region92: #{wln_predictor_forward.1} parent=0 // pred_region
    _
  $region93: #{wln_predictor_forward.1} parent=0 // pred_fallthru
    _
  // Predicated region
  $region94: #{wln_predictor_forward.1} parent=0 // pred_check
    _
  $region95: #{wln_predictor_forward.1} parent=0 // pred_check_branch
    %2034 = sbr.rel (0) target = $region97
  $region96: #{wln_predictor_forward.1} parent=0 // pred_region
    _
  $region97: #{wln_predictor_forward.1} parent=0 // pred_fallthru
    _

</llo_original>
